<compile_context>
chip_gen: v7x
topology: tpu7x:2x2x1
jax: 0.10.0
libtpu: 0.0.40
codegen_flags: <defaults>
</compile_context>

<pallas_src>
import functools

import jax
import jax.numpy as jnp
from jax import lax
from jax.experimental import pallas as pl
from jax.experimental.pallas import tpu as pltpu

LN_EPS = 1e-5  # torch.nn.LayerNorm default


def _layernorm(v, gamma, beta):
    # Fused single-pass LN: mean and E[v^2] are independent reductions
    # (var = E[v^2] - mean^2), instead of two serial passes.
    mu = jnp.mean(v, axis=-1, keepdims=True)
    m2 = jnp.mean(v * v, axis=-1, keepdims=True)
    var = m2 - mu * mu
    return (v - mu) * lax.rsqrt(var + LN_EPS) * gamma + beta


def _gen_lstm_kernel(xw_ref, whh_ref, gh_ref, bh_ref, gc_ref, bc_ref,
                     out_ref, h_scr, c_scr, *, h_size, steps_per_chunk):
    """grid = (batch_tiles, n_chunks); runs `steps_per_chunk` LSTM steps per call."""
    chunk = pl.program_id(1)

    # Reset h / c at the beginning of each batch tile's forward pass.
    @pl.when(chunk == 0)
    def _():
        h_scr[...] = jnp.zeros_like(h_scr)
        c_scr[...] = jnp.zeros_like(c_scr)

    xw = xw_ref[...]            # (Bt, 4H) precomputed x @ W_ih^T + bias (f32)
    whh = whh_ref[...]          # (H, 4H)  bf16 recurrent weights
    gh, bh = gh_ref[...], bh_ref[...]
    gc, bc = gc_ref[...], bc_ref[...]
    H = h_size

    def step(t, carry):
        h, c = carry
        # LayerNorm of the *previous* state, applied before the cell (including
        # on the initial zero state), exactly as in the PyTorch module.
        h = _layernorm(h, gh, bh)
        c = _layernorm(c, gc, bc)

        # LSTMCell: gates = [x @ W_ih^T + b] + h @ W_hh^T   (f32 accumulation)
        gates = xw + jnp.dot(h.astype(whh.dtype), whh,
                             preferred_element_type=jnp.float32)
        i_g = jax.nn.sigmoid(gates[:, 0 * H:1 * H])
        f_g = jax.nn.sigmoid(gates[:, 1 * H:2 * H])
        g_g = jnp.tanh(gates[:, 2 * H:3 * H])
        o_g = jax.nn.sigmoid(gates[:, 3 * H:4 * H])

        c_new = f_g * c + i_g * g_g
        h_new = o_g * jnp.tanh(c_new)
        out_ref[t] = h_new      # (Bt, H) slab for this step of the chunk
        return h_new, c_new

    h, c = lax.fori_loop(0, steps_per_chunk, step,
                         (h_scr[...], c_scr[...]), unroll=True)
    h_scr[...] = h
    c_scr[...] = c


def generative_lstm(x, params, n, *, steps_per_chunk=8, batch_block=None,
                    recurrent_dtype=jnp.bfloat16):
    """x: (B, I) f32.  Returns (B, N, H) f32, matching the PyTorch module."""
    assert n >= 1
    B, I = x.shape
    H = params["gamma_h"].shape[-1]
    if batch_block is None:
        batch_block = B                      # one batch tile (v5e/v6e default)
    assert B % batch_block == 0
    nb = B // batch_block                    # "parallel" axis (v7x megacore)

    T = min(int(steps_per_chunk), n)         # recurrence steps per grid step
    n_chunks = pl.cdiv(n, T)
    n_pad = n_chunks * T

    # --- Hoist the loop-invariant input projection out of the recurrence. ---
    xw = (jnp.dot(x, params["wih_t"], preferred_element_type=jnp.float32)
          + params["bias"]).astype(jnp.float32)                 # (B, 4H)
    whh = params["whh_t"].astype(recurrent_dtype)               # (H, 4H)

    kernel = functools.partial(_gen_lstm_kernel, h_size=H, steps_per_chunk=T)

    # Single-buffer operands whose block index never changes.
    const_spec = lambda shape: pl.BlockSpec(shape, lambda b, s: (0, 0),
                                            pipeline_mode=pl.Buffered(1))
    in_specs = [
        pl.BlockSpec((batch_block, 4 * H), lambda b, s: (b, 0)),  # xw (per batch tile)
        const_spec((H, 4 * H)),                                   # W_hh^T
        const_spec((1, H)),                                       # LN_h gamma
        const_spec((1, H)),                                       # LN_h beta
        const_spec((1, H)),                                       # LN_c gamma
        const_spec((1, H)),                                       # LN_c beta
    ]

    # Rough VMEM budget (single-buffered weights + double-buffered xw/output + scratch).
    itemsize_w = jnp.dtype(recurrent_dtype).itemsize
    resident = (2 * batch_block * 4 * H * 4        # xw (double-buffered)
                + H * 4 * H * itemsize_w           # W_hh (single-buffered)
                + 4 * H * 4                        # LN params
                + 2 * T * batch_block * H * 4      # output block (double-buffered)
                + 2 * batch_block * H * 4)         # h / c scratch
    vmem_limit = int(min(max(4 * resident, 32 * 2**20), 64 * 2**20))

    cost = pl.CostEstimate(
        flops=int(n_pad) * 2 * B * H * 4 * H,           # recurrent matmul per step
        transcendentals=int(n_pad) * B * (5 * H + 2),   # 4 gate nonlins + tanh(c) + 2 rsqrt
        bytes_accessed=(B * 4 * H * 4 + H * 4 * H * itemsize_w + 4 * H * 4
                        + int(n_pad) * B * H * 4),
    )

    out_nbh = pl.pallas_call(
        kernel,
        out_shape=jax.ShapeDtypeStruct((n_pad, B, H), jnp.float32),
        grid_spec=pltpu.PrefetchScalarGridSpec(
            num_scalar_prefetch=0,
            grid=(nb, n_chunks),
            in_specs=in_specs,
            out_specs=pl.BlockSpec((T, batch_block, H), lambda b, s: (s, b, 0)),
            scratch_shapes=[
                pltpu.VMEM((batch_block, H), jnp.float32),   # h carry
                pltpu.VMEM((batch_block, H), jnp.float32),   # c carry
            ],
        ),
        compiler_params=pltpu.CompilerParams(
            dimension_semantics=("parallel", "arbitrary"),   # batch || , steps serial
            vmem_limit_bytes=vmem_limit,
        ),
        cost_estimate=cost,
    )(xw, whh, params["gamma_h"], params["beta_h"],
      params["gamma_c"], params["beta_c"])

    out_nbh = out_nbh[:n]                       # drop chunk padding, if any
    return jnp.transpose(out_nbh, (1, 0, 2))    # (B, N, H)


def reference_forward(x, params, n):
    """Pure-JAX f32 reference mirroring the PyTorch forward."""
    B = x.shape[0]
    H = params["gamma_h"].shape[-1]

    def ln(v, gamma, beta):
        mu = jnp.mean(v, axis=-1, keepdims=True)
        var = jnp.mean((v - mu) ** 2, axis=-1, keepdims=True)
        return (v - mu) * lax.rsqrt(var + LN_EPS) * gamma + beta

    h = jnp.zeros((B, H), jnp.float32)
    c = jnp.zeros((B, H), jnp.float32)
    outs = []
    for _ in range(n):
        h = ln(h, params["gamma_h"], params["beta_h"])
        c = ln(c, params["gamma_c"], params["beta_c"])
        gates = x @ params["wih_t"] + h @ params["whh_t"] + params["bias"]
        i_g = jax.nn.sigmoid(gates[:, 0 * H:1 * H])
        f_g = jax.nn.sigmoid(gates[:, 1 * H:2 * H])
        g_g = jnp.tanh(gates[:, 2 * H:3 * H])
        o_g = jax.nn.sigmoid(gates[:, 3 * H:4 * H])
        c = f_g * c + i_g * g_g
        h = o_g * jnp.tanh(c)
        outs.append(h)
    return jnp.stack(outs, axis=1)


def init_params(key, inpt_size, h_size):
    """torch.nn.LSTMCell-style init (uniform(-1/sqrt(H), 1/sqrt(H)))."""
    k = 1.0 / jnp.sqrt(jnp.float32(h_size))
    ks = jax.random.split(key, 6)
    u = lambda kk, shape: jax.random.uniform(kk, shape, jnp.float32, -k, k)
    w_ih = u(ks[0], (4 * h_size, inpt_size))   # torch layout (4H, I)
    w_hh = u(ks[1], (4 * h_size, h_size))      # torch layout (4H, H)
    b_ih = u(ks[2], (4 * h_size,))
    b_hh = u(ks[3], (4 * h_size,))
    gamma_h = jnp.ones((1, h_size), jnp.float32)
    beta_h = 0.1 * jax.random.normal(ks[4], (1, h_size), jnp.float32)
    gamma_c = jnp.ones((1, h_size), jnp.float32)
    beta_c = 0.1 * jax.random.normal(ks[5], (1, h_size), jnp.float32)
    return {
        "wih_t": w_ih.T,                               # (I, 4H)
        "whh_t": w_hh.T,                               # (H, 4H)
        "bias": (b_ih + b_hh).reshape(1, 4 * h_size),  # (1, 4H)
        "gamma_h": gamma_h, "beta_h": beta_h,
        "gamma_c": gamma_c, "beta_c": beta_c,
    }


if __name__ == "__main__":
    # H=128 keeps the output slab and gate slices 128-lane aligned.
    B, I, H, N = 8, 32, 128, 16
    key = jax.random.PRNGKey(0)
    k_param, k_x = jax.random.split(key)

    params = init_params(k_param, I, H)
    x = jax.random.normal(k_x, (B, I), jnp.float32)

    out = generative_lstm(x, params, N, steps_per_chunk=8)
    out = jax.block_until_ready(out)

    ref = jax.block_until_ready(reference_forward(x, params, N))
    assert out.shape == (B, N, H), out.shape
    assert jnp.allclose(out, ref, atol=2e-2, rtol=2e-2), (
        float(jnp.max(jnp.abs(out - ref))))

    print("KERNEL_OK")
</pallas_src>

<mosaic_0001>
module attributes {stable_mosaic.version = 11 : i64} {
  func.func @_gen_lstm_kernel(%arg0: i32, %arg1: i32, %arg2: memref<8x512xf32, #tpu.memory_space<vmem>>, %arg3: memref<128x512xbf16, #tpu.memory_space<vmem>>, %arg4: memref<1x128xf32, #tpu.memory_space<vmem>>, %arg5: memref<1x128xf32, #tpu.memory_space<vmem>>, %arg6: memref<1x128xf32, #tpu.memory_space<vmem>>, %arg7: memref<1x128xf32, #tpu.memory_space<vmem>>, %arg8: memref<8x8x128xf32, #tpu.memory_space<vmem>>, %arg9: memref<8x128xf32, #tpu.memory_space<vmem>>, %arg10: memref<8x128xf32, #tpu.memory_space<vmem>>) attributes {dimension_semantics = [#tpu.dimension_semantics<parallel>, #tpu.dimension_semantics<arbitrary>], iteration_bounds = array<i64: 1, 2>, scalar_prefetch = 0 : i64, scratch_operands = 2 : i64, tpu.core_type = #tpu.core_type<tc>, window_params = [{transform_indices = @transform_0, window_bounds = array<i64: 8, 512>}, {pipeline_mode = #tpu.pipeline_mode<synchronous>, transform_indices = @transform_1, window_bounds = array<i64: 128, 512>}, {pipeline_mode = #tpu.pipeline_mode<synchronous>, transform_indices = @transform_2, window_bounds = array<i64: 1, 128>}, {pipeline_mode = #tpu.pipeline_mode<synchronous>, transform_indices = @transform_3, window_bounds = array<i64: 1, 128>}, {pipeline_mode = #tpu.pipeline_mode<synchronous>, transform_indices = @transform_4, window_bounds = array<i64: 1, 128>}, {pipeline_mode = #tpu.pipeline_mode<synchronous>, transform_indices = @transform_5, window_bounds = array<i64: 1, 128>}, {transform_indices = @transform_6, window_bounds = array<i64: 8, 8, 128>}]} {
    %c0_i32 = arith.constant 0 : i32
    %0 = arith.cmpi eq, %arg1, %c0_i32 : i32
    %1 = arith.extui %0 : i1 to i32
    %c0_i32_0 = arith.constant 0 : i32
    %2 = arith.cmpi ne, %1, %c0_i32_0 : i32
    scf.if %2 {
      %cst_148 = arith.constant 0.000000e+00 : f32
      %621 = vector.broadcast %cst_148 : f32 to vector<8x128xf32>
      %c0_149 = arith.constant 0 : index
      %c0_150 = arith.constant 0 : index
      %622 = vector.load %arg9[%c0_149, %c0_150] : memref<8x128xf32, #tpu.memory_space<vmem>>, vector<8x128xf32>
      tpu.vector_store %arg9[%c0_149, %c0_150], %621 {strides = array<i32>} : memref<8x128xf32, #tpu.memory_space<vmem>>, vector<8x128xf32>,
      %cst_151 = arith.constant 0.000000e+00 : f32
      %623 = vector.broadcast %cst_151 : f32 to vector<8x128xf32>
      %c0_152 = arith.constant 0 : index
      %c0_153 = arith.constant 0 : index
      %624 = vector.load %arg10[%c0_152, %c0_153] : memref<8x128xf32, #tpu.memory_space<vmem>>, vector<8x128xf32>
      tpu.vector_store %arg10[%c0_152, %c0_153], %623 {strides = array<i32>} : memref<8x128xf32, #tpu.memory_space<vmem>>, vector<8x128xf32>,
    } else {
    }
    %c0 = arith.constant 0 : index
    %c0_1 = arith.constant 0 : index
    %3 = vector.load %arg2[%c0, %c0_1] : memref<8x512xf32, #tpu.memory_space<vmem>>, vector<8x512xf32>
    %c0_2 = arith.constant 0 : index
    %c0_3 = arith.constant 0 : index
    %4 = vector.load %arg3[%c0_2, %c0_3] : memref<128x512xbf16, #tpu.memory_space<vmem>>, vector<128x512xbf16>
    %c0_4 = arith.constant 0 : index
    %c0_5 = arith.constant 0 : index
    %5 = vector.load %arg4[%c0_4, %c0_5] : memref<1x128xf32, #tpu.memory_space<vmem>>, vector<1x128xf32>
    %c0_6 = arith.constant 0 : index
    %c0_7 = arith.constant 0 : index
    %6 = vector.load %arg5[%c0_6, %c0_7] : memref<1x128xf32, #tpu.memory_space<vmem>>, vector<1x128xf32>
    %c0_8 = arith.constant 0 : index
    %c0_9 = arith.constant 0 : index
    %7 = vector.load %arg6[%c0_8, %c0_9] : memref<1x128xf32, #tpu.memory_space<vmem>>, vector<1x128xf32>
    %c0_10 = arith.constant 0 : index
    %c0_11 = arith.constant 0 : index
    %8 = vector.load %arg7[%c0_10, %c0_11] : memref<1x128xf32, #tpu.memory_space<vmem>>, vector<1x128xf32>
    %c0_12 = arith.constant 0 : index
    %c0_13 = arith.constant 0 : index
    %9 = vector.load %arg9[%c0_12, %c0_13] : memref<8x128xf32, #tpu.memory_space<vmem>>, vector<8x128xf32>
    %c0_14 = arith.constant 0 : index
    %c0_15 = arith.constant 0 : index
    %10 = vector.load %arg10[%c0_14, %c0_15] : memref<8x128xf32, #tpu.memory_space<vmem>>, vector<8x128xf32>
    %c0_i32_16 = arith.constant 0 : i32
    %cst = arith.constant dense<0.000000e+00> : vector<8xf32>
    %11 = vector.multi_reduction <add>, %9, %cst [1] : vector<8x128xf32> to vector<8xf32>
    %12 = vector.shape_cast %11 : vector<8xf32> to vector<8x1xf32>
    %cst_17 = arith.constant 1.280000e+02 : f32
    %13 = vector.broadcast %cst_17 : f32 to vector<8x1xf32>
    %14 = arith.divf %12, %13 : vector<8x1xf32>
    %15 = arith.mulf %9, %9 : vector<8x128xf32>
    %cst_18 = arith.constant dense<0.000000e+00> : vector<8xf32>
    %16 = vector.multi_reduction <add>, %15, %cst_18 [1] : vector<8x128xf32> to vector<8xf32>
    %17 = vector.shape_cast %16 : vector<8xf32> to vector<8x1xf32>
    %cst_19 = arith.constant 1.280000e+02 : f32
    %18 = vector.broadcast %cst_19 : f32 to vector<8x1xf32>
    %19 = arith.divf %17, %18 : vector<8x1xf32>
    %20 = arith.mulf %14, %14 : vector<8x1xf32>
    %21 = arith.subf %19, %20 : vector<8x1xf32>
    %22 = vector.broadcast %14 : vector<8x1xf32> to vector<8x128xf32>
    %23 = arith.subf %9, %22 : vector<8x128xf32>
    %cst_20 = arith.constant 9.99999974E-6 : f32
    %24 = vector.broadcast %cst_20 : f32 to vector<8x1xf32>
    %25 = arith.addf %21, %24 : vector<8x1xf32>
    %26 = math.rsqrt %25 : vector<8x1xf32>
    %27 = vector.broadcast %26 : vector<8x1xf32> to vector<8x128xf32>
    %28 = arith.mulf %23, %27 : vector<8x128xf32>
    %29 = vector.broadcast %5 : vector<1x128xf32> to vector<8x128xf32>
    %30 = arith.mulf %28, %29 : vector<8x128xf32>
    %31 = vector.broadcast %6 : vector<1x128xf32> to vector<8x128xf32>
    %32 = arith.addf %30, %31 : vector<8x128xf32>
    %cst_21 = arith.constant dense<0.000000e+00> : vector<8xf32>
    %33 = vector.multi_reduction <add>, %10, %cst_21 [1] : vector<8x128xf32> to vector<8xf32>
    %34 = vector.shape_cast %33 : vector<8xf32> to vector<8x1xf32>
    %cst_22 = arith.constant 1.280000e+02 : f32
    %35 = vector.broadcast %cst_22 : f32 to vector<8x1xf32>
    %36 = arith.divf %34, %35 : vector<8x1xf32>
    %37 = arith.mulf %10, %10 : vector<8x128xf32>
    %cst_23 = arith.constant dense<0.000000e+00> : vector<8xf32>
    %38 = vector.multi_reduction <add>, %37, %cst_23 [1] : vector<8x128xf32> to vector<8xf32>
    %39 = vector.shape_cast %38 : vector<8xf32> to vector<8x1xf32>
    %cst_24 = arith.constant 1.280000e+02 : f32
    %40 = vector.broadcast %cst_24 : f32 to vector<8x1xf32>
    %41 = arith.divf %39, %40 : vector<8x1xf32>
    %42 = arith.mulf %36, %36 : vector<8x1xf32>
    %43 = arith.subf %41, %42 : vector<8x1xf32>
    %44 = vector.broadcast %36 : vector<8x1xf32> to vector<8x128xf32>
    %45 = arith.subf %10, %44 : vector<8x128xf32>
    %cst_25 = arith.constant 9.99999974E-6 : f32
    %46 = vector.broadcast %cst_25 : f32 to vector<8x1xf32>
    %47 = arith.addf %43, %46 : vector<8x1xf32>
    %48 = math.rsqrt %47 : vector<8x1xf32>
    %49 = vector.broadcast %48 : vector<8x1xf32> to vector<8x128xf32>
    %50 = arith.mulf %45, %49 : vector<8x128xf32>
    %51 = vector.broadcast %7 : vector<1x128xf32> to vector<8x128xf32>
    %52 = arith.mulf %50, %51 : vector<8x128xf32>
    %53 = vector.broadcast %8 : vector<1x128xf32> to vector<8x128xf32>
    %54 = arith.addf %52, %53 : vector<8x128xf32>
    %55 = arith.truncf %32 : vector<8x128xf32> to vector<8x128xbf16>
    %cst_26 = arith.constant dense<0.000000e+00> : vector<8x512xf32>
    %56 = tpu.matmul %55, %4, %cst_26 {dimension_numbers = #tpu.dot_dimension_numbers<[1], [0], [0], [1], [0, 0, 1, 1], [], []>} : vector<8x128xbf16>, vector<128x512xbf16>, vector<8x512xf32> -> vector<8x512xf32>
    %57 = arith.addf %3, %56 : vector<8x512xf32>
    %58 = vector.extract_strided_slice %57 {offsets = [0, 0], sizes = [8, 128], strides = [1, 1]} : vector<8x512xf32> to vector<8x128xf32>
    %59 = arith.negf %58 : vector<8x128xf32>
    %60 = math.exp %59 : vector<8x128xf32>
    %cst_27 = arith.constant 1.000000e+00 : f32
    %61 = vector.broadcast %cst_27 : f32 to vector<8x128xf32>
    %62 = arith.addf %61, %60 : vector<8x128xf32>
    %63 = arith.divf %61, %62 : vector<8x128xf32>
    %64 = vector.extract_strided_slice %57 {offsets = [0, 128], sizes = [8, 128], strides = [1, 1]} : vector<8x512xf32> to vector<8x128xf32>
    %65 = arith.negf %64 : vector<8x128xf32>
    %66 = math.exp %65 : vector<8x128xf32>
    %cst_28 = arith.constant 1.000000e+00 : f32
    %67 = vector.broadcast %cst_28 : f32 to vector<8x128xf32>
    %68 = arith.addf %67, %66 : vector<8x128xf32>
    %69 = arith.divf %67, %68 : vector<8x128xf32>
    %70 = vector.extract_strided_slice %57 {offsets = [0, 256], sizes = [8, 128], strides = [1, 1]} : vector<8x512xf32> to vector<8x128xf32>
    %71 = math.tanh %70 : vector<8x128xf32>
    %72 = vector.extract_strided_slice %57 {offsets = [0, 384], sizes = [8, 128], strides = [1, 1]} : vector<8x512xf32> to vector<8x128xf32>
    %73 = arith.negf %72 : vector<8x128xf32>
    %74 = math.exp %73 : vector<8x128xf32>
    %cst_29 = arith.constant 1.000000e+00 : f32
    %75 = vector.broadcast %cst_29 : f32 to vector<8x128xf32>
    %76 = arith.addf %75, %74 : vector<8x128xf32>
    %77 = arith.divf %75, %76 : vector<8x128xf32>
    %78 = arith.mulf %69, %54 : vector<8x128xf32>
    %79 = arith.mulf %63, %71 : vector<8x128xf32>
    %80 = arith.addf %78, %79 : vector<8x128xf32>
    %81 = math.tanh %80 : vector<8x128xf32>
    %82 = arith.mulf %77, %81 : vector<8x128xf32>
    %83 = arith.index_cast %c0_i32_16 : i32 to index
    %c0_30 = arith.constant 0 : index
    %c0_31 = arith.constant 0 : index
    %84 = vector.load %arg8[%83, %c0_30, %c0_31] : memref<8x8x128xf32, #tpu.memory_space<vmem>>, vector<1x8x128xf32>
    %85 = vector.shape_cast %84 : vector<1x8x128xf32> to vector<8x128xf32>
    %86 = vector.shape_cast %82 : vector<8x128xf32> to vector<1x8x128xf32>
    tpu.vector_store %arg8[%83, %c0_30, %c0_31], %86 {strides = array<i32>} : memref<8x8x128xf32, #tpu.memory_space<vmem>>, vector<1x8x128xf32>,
    %c1_i32 = arith.constant 1 : i32
    %cst_32 = arith.constant dense<0.000000e+00> : vector<8xf32>
    %87 = vector.multi_reduction <add>, %82, %cst_32 [1] : vector<8x128xf32> to vector<8xf32>
    %88 = vector.shape_cast %87 : vector<8xf32> to vector<8x1xf32>
    %cst_33 = arith.constant 1.280000e+02 : f32
    %89 = vector.broadcast %cst_33 : f32 to vector<8x1xf32>
    %90 = arith.divf %88, %89 : vector<8x1xf32>
    %91 = arith.mulf %82, %82 : vector<8x128xf32>
    %cst_34 = arith.constant dense<0.000000e+00> : vector<8xf32>
    %92 = vector.multi_reduction <add>, %91, %cst_34 [1] : vector<8x128xf32> to vector<8xf32>
    %93 = vector.shape_cast %92 : vector<8xf32> to vector<8x1xf32>
    %cst_35 = arith.constant 1.280000e+02 : f32
    %94 = vector.broadcast %cst_35 : f32 to vector<8x1xf32>
    %95 = arith.divf %93, %94 : vector<8x1xf32>
    %96 = arith.mulf %90, %90 : vector<8x1xf32>
    %97 = arith.subf %95, %96 : vector<8x1xf32>
    %98 = vector.broadcast %90 : vector<8x1xf32> to vector<8x128xf32>
    %99 = arith.subf %82, %98 : vector<8x128xf32>
    %cst_36 = arith.constant 9.99999974E-6 : f32
    %100 = vector.broadcast %cst_36 : f32 to vector<8x1xf32>
    %101 = arith.addf %97, %100 : vector<8x1xf32>
    %102 = math.rsqrt %101 : vector<8x1xf32>
    %103 = vector.broadcast %102 : vector<8x1xf32> to vector<8x128xf32>
    %104 = arith.mulf %99, %103 : vector<8x128xf32>
    %105 = vector.broadcast %5 : vector<1x128xf32> to vector<8x128xf32>
    %106 = arith.mulf %104, %105 : vector<8x128xf32>
    %107 = vector.broadcast %6 : vector<1x128xf32> to vector<8x128xf32>
    %108 = arith.addf %106, %107 : vector<8x128xf32>
    %cst_37 = arith.constant dense<0.000000e+00> : vector<8xf32>
    %109 = vector.multi_reduction <add>, %80, %cst_37 [1] : vector<8x128xf32> to vector<8xf32>
    %110 = vector.shape_cast %109 : vector<8xf32> to vector<8x1xf32>
    %cst_38 = arith.constant 1.280000e+02 : f32
    %111 = vector.broadcast %cst_38 : f32 to vector<8x1xf32>
    %112 = arith.divf %110, %111 : vector<8x1xf32>
    %113 = arith.mulf %80, %80 : vector<8x128xf32>
    %cst_39 = arith.constant dense<0.000000e+00> : vector<8xf32>
    %114 = vector.multi_reduction <add>, %113, %cst_39 [1] : vector<8x128xf32> to vector<8xf32>
    %115 = vector.shape_cast %114 : vector<8xf32> to vector<8x1xf32>
    %cst_40 = arith.constant 1.280000e+02 : f32
    %116 = vector.broadcast %cst_40 : f32 to vector<8x1xf32>
    %117 = arith.divf %115, %116 : vector<8x1xf32>
    %118 = arith.mulf %112, %112 : vector<8x1xf32>
    %119 = arith.subf %117, %118 : vector<8x1xf32>
    %120 = vector.broadcast %112 : vector<8x1xf32> to vector<8x128xf32>
    %121 = arith.subf %80, %120 : vector<8x128xf32>
    %cst_41 = arith.constant 9.99999974E-6 : f32
    %122 = vector.broadcast %cst_41 : f32 to vector<8x1xf32>
    %123 = arith.addf %119, %122 : vector<8x1xf32>
    %124 = math.rsqrt %123 : vector<8x1xf32>
    %125 = vector.broadcast %124 : vector<8x1xf32> to vector<8x128xf32>
    %126 = arith.mulf %121, %125 : vector<8x128xf32>
    %127 = vector.broadcast %7 : vector<1x128xf32> to vector<8x128xf32>
    %128 = arith.mulf %126, %127 : vector<8x128xf32>
    %129 = vector.broadcast %8 : vector<1x128xf32> to vector<8x128xf32>
    %130 = arith.addf %128, %129 : vector<8x128xf32>
    %131 = arith.truncf %108 : vector<8x128xf32> to vector<8x128xbf16>
    %cst_42 = arith.constant dense<0.000000e+00> : vector<8x512xf32>
    %132 = tpu.matmul %131, %4, %cst_42 {dimension_numbers = #tpu.dot_dimension_numbers<[1], [0], [0], [1], [0, 0, 1, 1], [], []>} : vector<8x128xbf16>, vector<128x512xbf16>, vector<8x512xf32> -> vector<8x512xf32>
    %133 = arith.addf %3, %132 : vector<8x512xf32>
    %134 = vector.extract_strided_slice %133 {offsets = [0, 0], sizes = [8, 128], strides = [1, 1]} : vector<8x512xf32> to vector<8x128xf32>
    %135 = arith.negf %134 : vector<8x128xf32>
    %136 = math.exp %135 : vector<8x128xf32>
    %cst_43 = arith.constant 1.000000e+00 : f32
    %137 = vector.broadcast %cst_43 : f32 to vector<8x128xf32>
    %138 = arith.addf %137, %136 : vector<8x128xf32>
    %139 = arith.divf %137, %138 : vector<8x128xf32>
    %140 = vector.extract_strided_slice %133 {offsets = [0, 128], sizes = [8, 128], strides = [1, 1]} : vector<8x512xf32> to vector<8x128xf32>
    %141 = arith.negf %140 : vector<8x128xf32>
    %142 = math.exp %141 : vector<8x128xf32>
    %cst_44 = arith.constant 1.000000e+00 : f32
    %143 = vector.broadcast %cst_44 : f32 to vector<8x128xf32>
    %144 = arith.addf %143, %142 : vector<8x128xf32>
    %145 = arith.divf %143, %144 : vector<8x128xf32>
    %146 = vector.extract_strided_slice %133 {offsets = [0, 256], sizes = [8, 128], strides = [1, 1]} : vector<8x512xf32> to vector<8x128xf32>
    %147 = math.tanh %146 : vector<8x128xf32>
    %148 = vector.extract_strided_slice %133 {offsets = [0, 384], sizes = [8, 128], strides = [1, 1]} : vector<8x512xf32> to vector<8x128xf32>
    %149 = arith.negf %148 : vector<8x128xf32>
    %150 = math.exp %149 : vector<8x128xf32>
    %cst_45 = arith.constant 1.000000e+00 : f32
    %151 = vector.broadcast %cst_45 : f32 to vector<8x128xf32>
    %152 = arith.addf %151, %150 : vector<8x128xf32>
    %153 = arith.divf %151, %152 : vector<8x128xf32>
    %154 = arith.mulf %145, %130 : vector<8x128xf32>
    %155 = arith.mulf %139, %147 : vector<8x128xf32>
    %156 = arith.addf %154, %155 : vector<8x128xf32>
    %157 = math.tanh %156 : vector<8x128xf32>
    %158 = arith.mulf %153, %157 : vector<8x128xf32>
    %159 = arith.index_cast %c1_i32 : i32 to index
    %c0_46 = arith.constant 0 : index
    %c0_47 = arith.constant 0 : index
    %160 = vector.load %arg8[%159, %c0_46, %c0_47] : memref<8x8x128xf32, #tpu.memory_space<vmem>>, vector<1x8x128xf32>
    %161 = vector.shape_cast %160 : vector<1x8x128xf32> to vector<8x128xf32>
    %162 = vector.shape_cast %158 : vector<8x128xf32> to vector<1x8x128xf32>
    tpu.vector_store %arg8[%159, %c0_46, %c0_47], %162 {strides = array<i32>} : memref<8x8x128xf32, #tpu.memory_space<vmem>>, vector<1x8x128xf32>,
    %c2_i32 = arith.constant 2 : i32
    %cst_48 = arith.constant dense<0.000000e+00> : vector<8xf32>
    %163 = vector.multi_reduction <add>, %158, %cst_48 [1] : vector<8x128xf32> to vector<8xf32>
    %164 = vector.shape_cast %163 : vector<8xf32> to vector<8x1xf32>
    %cst_49 = arith.constant 1.280000e+02 : f32
    %165 = vector.broadcast %cst_49 : f32 to vector<8x1xf32>
    %166 = arith.divf %164, %165 : vector<8x1xf32>
    %167 = arith.mulf %158, %158 : vector<8x128xf32>
    %cst_50 = arith.constant dense<0.000000e+00> : vector<8xf32>
    %168 = vector.multi_reduction <add>, %167, %cst_50 [1] : vector<8x128xf32> to vector<8xf32>
    %169 = vector.shape_cast %168 : vector<8xf32> to vector<8x1xf32>
    %cst_51 = arith.constant 1.280000e+02 : f32
    %170 = vector.broadcast %cst_51 : f32 to vector<8x1xf32>
    %171 = arith.divf %169, %170 : vector<8x1xf32>
    %172 = arith.mulf %166, %166 : vector<8x1xf32>
    %173 = arith.subf %171, %172 : vector<8x1xf32>
    %174 = vector.broadcast %166 : vector<8x1xf32> to vector<8x128xf32>
    %175 = arith.subf %158, %174 : vector<8x128xf32>
    %cst_52 = arith.constant 9.99999974E-6 : f32
    %176 = vector.broadcast %cst_52 : f32 to vector<8x1xf32>
    %177 = arith.addf %173, %176 : vector<8x1xf32>
    %178 = math.rsqrt %177 : vector<8x1xf32>
    %179 = vector.broadcast %178 : vector<8x1xf32> to vector<8x128xf32>
    %180 = arith.mulf %175, %179 : vector<8x128xf32>
    %181 = vector.broadcast %5 : vector<1x128xf32> to vector<8x128xf32>
    %182 = arith.mulf %180, %181 : vector<8x128xf32>
    %183 = vector.broadcast %6 : vector<1x128xf32> to vector<8x128xf32>
    %184 = arith.addf %182, %183 : vector<8x128xf32>
    %cst_53 = arith.constant dense<0.000000e+00> : vector<8xf32>
    %185 = vector.multi_reduction <add>, %156, %cst_53 [1] : vector<8x128xf32> to vector<8xf32>
    %186 = vector.shape_cast %185 : vector<8xf32> to vector<8x1xf32>
    %cst_54 = arith.constant 1.280000e+02 : f32
    %187 = vector.broadcast %cst_54 : f32 to vector<8x1xf32>
    %188 = arith.divf %186, %187 : vector<8x1xf32>
    %189 = arith.mulf %156, %156 : vector<8x128xf32>
    %cst_55 = arith.constant dense<0.000000e+00> : vector<8xf32>
    %190 = vector.multi_reduction <add>, %189, %cst_55 [1] : vector<8x128xf32> to vector<8xf32>
    %191 = vector.shape_cast %190 : vector<8xf32> to vector<8x1xf32>
    %cst_56 = arith.constant 1.280000e+02 : f32
    %192 = vector.broadcast %cst_56 : f32 to vector<8x1xf32>
    %193 = arith.divf %191, %192 : vector<8x1xf32>
    %194 = arith.mulf %188, %188 : vector<8x1xf32>
    %195 = arith.subf %193, %194 : vector<8x1xf32>
    %196 = vector.broadcast %188 : vector<8x1xf32> to vector<8x128xf32>
    %197 = arith.subf %156, %196 : vector<8x128xf32>
    %cst_57 = arith.constant 9.99999974E-6 : f32
    %198 = vector.broadcast %cst_57 : f32 to vector<8x1xf32>
    %199 = arith.addf %195, %198 : vector<8x1xf32>
    %200 = math.rsqrt %199 : vector<8x1xf32>
    %201 = vector.broadcast %200 : vector<8x1xf32> to vector<8x128xf32>
    %202 = arith.mulf %197, %201 : vector<8x128xf32>
    %203 = vector.broadcast %7 : vector<1x128xf32> to vector<8x128xf32>
    %204 = arith.mulf %202, %203 : vector<8x128xf32>
    %205 = vector.broadcast %8 : vector<1x128xf32> to vector<8x128xf32>
    %206 = arith.addf %204, %205 : vector<8x128xf32>
    %207 = arith.truncf %184 : vector<8x128xf32> to vector<8x128xbf16>
    %cst_58 = arith.constant dense<0.000000e+00> : vector<8x512xf32>
    %208 = tpu.matmul %207, %4, %cst_58 {dimension_numbers = #tpu.dot_dimension_numbers<[1], [0], [0], [1], [0, 0, 1, 1], [], []>} : vector<8x128xbf16>, vector<128x512xbf16>, vector<8x512xf32> -> vector<8x512xf32>
    %209 = arith.addf %3, %208 : vector<8x512xf32>
    %210 = vector.extract_strided_slice %209 {offsets = [0, 0], sizes = [8, 128], strides = [1, 1]} : vector<8x512xf32> to vector<8x128xf32>
    %211 = arith.negf %210 : vector<8x128xf32>
    %212 = math.exp %211 : vector<8x128xf32>
    %cst_59 = arith.constant 1.000000e+00 : f32
    %213 = vector.broadcast %cst_59 : f32 to vector<8x128xf32>
    %214 = arith.addf %213, %212 : vector<8x128xf32>
    %215 = arith.divf %213, %214 : vector<8x128xf32>
    %216 = vector.extract_strided_slice %209 {offsets = [0, 128], sizes = [8, 128], strides = [1, 1]} : vector<8x512xf32> to vector<8x128xf32>
    %217 = arith.negf %216 : vector<8x128xf32>
    %218 = math.exp %217 : vector<8x128xf32>
    %cst_60 = arith.constant 1.000000e+00 : f32
    %219 = vector.broadcast %cst_60 : f32 to vector<8x128xf32>
    %220 = arith.addf %219, %218 : vector<8x128xf32>
    %221 = arith.divf %219, %220 : vector<8x128xf32>
    %222 = vector.extract_strided_slice %209 {offsets = [0, 256], sizes = [8, 128], strides = [1, 1]} : vector<8x512xf32> to vector<8x128xf32>
    %223 = math.tanh %222 : vector<8x128xf32>
    %224 = vector.extract_strided_slice %209 {offsets = [0, 384], sizes = [8, 128], strides = [1, 1]} : vector<8x512xf32> to vector<8x128xf32>
    %225 = arith.negf %224 : vector<8x128xf32>
    %226 = math.exp %225 : vector<8x128xf32>
    %cst_61 = arith.constant 1.000000e+00 : f32
    %227 = vector.broadcast %cst_61 : f32 to vector<8x128xf32>
    %228 = arith.addf %227, %226 : vector<8x128xf32>
    %229 = arith.divf %227, %228 : vector<8x128xf32>
    %230 = arith.mulf %221, %206 : vector<8x128xf32>
    %231 = arith.mulf %215, %223 : vector<8x128xf32>
    %232 = arith.addf %230, %231 : vector<8x128xf32>
    %233 = math.tanh %232 : vector<8x128xf32>
    %234 = arith.mulf %229, %233 : vector<8x128xf32>
    %235 = arith.index_cast %c2_i32 : i32 to index
    %c0_62 = arith.constant 0 : index
    %c0_63 = arith.constant 0 : index
    %236 = vector.load %arg8[%235, %c0_62, %c0_63] : memref<8x8x128xf32, #tpu.memory_space<vmem>>, vector<1x8x128xf32>
    %237 = vector.shape_cast %236 : vector<1x8x128xf32> to vector<8x128xf32>
    %238 = vector.shape_cast %234 : vector<8x128xf32> to vector<1x8x128xf32>
    tpu.vector_store %arg8[%235, %c0_62, %c0_63], %238 {strides = array<i32>} : memref<8x8x128xf32, #tpu.memory_space<vmem>>, vector<1x8x128xf32>,
    %c3_i32 = arith.constant 3 : i32
    %cst_64 = arith.constant dense<0.000000e+00> : vector<8xf32>
    %239 = vector.multi_reduction <add>, %234, %cst_64 [1] : vector<8x128xf32> to vector<8xf32>
    %240 = vector.shape_cast %239 : vector<8xf32> to vector<8x1xf32>
    %cst_65 = arith.constant 1.280000e+02 : f32
    %241 = vector.broadcast %cst_65 : f32 to vector<8x1xf32>
    %242 = arith.divf %240, %241 : vector<8x1xf32>
    %243 = arith.mulf %234, %234 : vector<8x128xf32>
    %cst_66 = arith.constant dense<0.000000e+00> : vector<8xf32>
    %244 = vector.multi_reduction <add>, %243, %cst_66 [1] : vector<8x128xf32> to vector<8xf32>
    %245 = vector.shape_cast %244 : vector<8xf32> to vector<8x1xf32>
    %cst_67 = arith.constant 1.280000e+02 : f32
    %246 = vector.broadcast %cst_67 : f32 to vector<8x1xf32>
    %247 = arith.divf %245, %246 : vector<8x1xf32>
    %248 = arith.mulf %242, %242 : vector<8x1xf32>
    %249 = arith.subf %247, %248 : vector<8x1xf32>
    %250 = vector.broadcast %242 : vector<8x1xf32> to vector<8x128xf32>
    %251 = arith.subf %234, %250 : vector<8x128xf32>
    %cst_68 = arith.constant 9.99999974E-6 : f32
    %252 = vector.broadcast %cst_68 : f32 to vector<8x1xf32>
    %253 = arith.addf %249, %252 : vector<8x1xf32>
    %254 = math.rsqrt %253 : vector<8x1xf32>
    %255 = vector.broadcast %254 : vector<8x1xf32> to vector<8x128xf32>
    %256 = arith.mulf %251, %255 : vector<8x128xf32>
    %257 = vector.broadcast %5 : vector<1x128xf32> to vector<8x128xf32>
    %258 = arith.mulf %256, %257 : vector<8x128xf32>
    %259 = vector.broadcast %6 : vector<1x128xf32> to vector<8x128xf32>
    %260 = arith.addf %258, %259 : vector<8x128xf32>
    %cst_69 = arith.constant dense<0.000000e+00> : vector<8xf32>
    %261 = vector.multi_reduction <add>, %232, %cst_69 [1] : vector<8x128xf32> to vector<8xf32>
    %262 = vector.shape_cast %261 : vector<8xf32> to vector<8x1xf32>
    %cst_70 = arith.constant 1.280000e+02 : f32
    %263 = vector.broadcast %cst_70 : f32 to vector<8x1xf32>
    %264 = arith.divf %262, %263 : vector<8x1xf32>
    %265 = arith.mulf %232, %232 : vector<8x128xf32>
    %cst_71 = arith.constant dense<0.000000e+00> : vector<8xf32>
    %266 = vector.multi_reduction <add>, %265, %cst_71 [1] : vector<8x128xf32> to vector<8xf32>
    %267 = vector.shape_cast %266 : vector<8xf32> to vector<8x1xf32>
    %cst_72 = arith.constant 1.280000e+02 : f32
    %268 = vector.broadcast %cst_72 : f32 to vector<8x1xf32>
    %269 = arith.divf %267, %268 : vector<8x1xf32>
    %270 = arith.mulf %264, %264 : vector<8x1xf32>
    %271 = arith.subf %269, %270 : vector<8x1xf32>
    %272 = vector.broadcast %264 : vector<8x1xf32> to vector<8x128xf32>
    %273 = arith.subf %232, %272 : vector<8x128xf32>
    %cst_73 = arith.constant 9.99999974E-6 : f32
    %274 = vector.broadcast %cst_73 : f32 to vector<8x1xf32>
    %275 = arith.addf %271, %274 : vector<8x1xf32>
    %276 = math.rsqrt %275 : vector<8x1xf32>
    %277 = vector.broadcast %276 : vector<8x1xf32> to vector<8x128xf32>
    %278 = arith.mulf %273, %277 : vector<8x128xf32>
    %279 = vector.broadcast %7 : vector<1x128xf32> to vector<8x128xf32>
    %280 = arith.mulf %278, %279 : vector<8x128xf32>
    %281 = vector.broadcast %8 : vector<1x128xf32> to vector<8x128xf32>
    %282 = arith.addf %280, %281 : vector<8x128xf32>
    %283 = arith.truncf %260 : vector<8x128xf32> to vector<8x128xbf16>
    %cst_74 = arith.constant dense<0.000000e+00> : vector<8x512xf32>
    %284 = tpu.matmul %283, %4, %cst_74 {dimension_numbers = #tpu.dot_dimension_numbers<[1], [0], [0], [1], [0, 0, 1, 1], [], []>} : vector<8x128xbf16>, vector<128x512xbf16>, vector<8x512xf32> -> vector<8x512xf32>
    %285 = arith.addf %3, %284 : vector<8x512xf32>
    %286 = vector.extract_strided_slice %285 {offsets = [0, 0], sizes = [8, 128], strides = [1, 1]} : vector<8x512xf32> to vector<8x128xf32>
    %287 = arith.negf %286 : vector<8x128xf32>
    %288 = math.exp %287 : vector<8x128xf32>
    %cst_75 = arith.constant 1.000000e+00 : f32
    %289 = vector.broadcast %cst_75 : f32 to vector<8x128xf32>
    %290 = arith.addf %289, %288 : vector<8x128xf32>
    %291 = arith.divf %289, %290 : vector<8x128xf32>
    %292 = vector.extract_strided_slice %285 {offsets = [0, 128], sizes = [8, 128], strides = [1, 1]} : vector<8x512xf32> to vector<8x128xf32>
    %293 = arith.negf %292 : vector<8x128xf32>
    %294 = math.exp %293 : vector<8x128xf32>
    %cst_76 = arith.constant 1.000000e+00 : f32
    %295 = vector.broadcast %cst_76 : f32 to vector<8x128xf32>
    %296 = arith.addf %295, %294 : vector<8x128xf32>
    %297 = arith.divf %295, %296 : vector<8x128xf32>
    %298 = vector.extract_strided_slice %285 {offsets = [0, 256], sizes = [8, 128], strides = [1, 1]} : vector<8x512xf32> to vector<8x128xf32>
    %299 = math.tanh %298 : vector<8x128xf32>
    %300 = vector.extract_strided_slice %285 {offsets = [0, 384], sizes = [8, 128], strides = [1, 1]} : vector<8x512xf32> to vector<8x128xf32>
    %301 = arith.negf %300 : vector<8x128xf32>
    %302 = math.exp %301 : vector<8x128xf32>
    %cst_77 = arith.constant 1.000000e+00 : f32
    %303 = vector.broadcast %cst_77 : f32 to vector<8x128xf32>
    %304 = arith.addf %303, %302 : vector<8x128xf32>
    %305 = arith.divf %303, %304 : vector<8x128xf32>
    %306 = arith.mulf %297, %282 : vector<8x128xf32>
    %307 = arith.mulf %291, %299 : vector<8x128xf32>
    %308 = arith.addf %306, %307 : vector<8x128xf32>
    %309 = math.tanh %308 : vector<8x128xf32>
    %310 = arith.mulf %305, %309 : vector<8x128xf32>
    %311 = arith.index_cast %c3_i32 : i32 to index
    %c0_78 = arith.constant 0 : index
    %c0_79 = arith.constant 0 : index
    %312 = vector.load %arg8[%311, %c0_78, %c0_79] : memref<8x8x128xf32, #tpu.memory_space<vmem>>, vector<1x8x128xf32>
    %313 = vector.shape_cast %312 : vector<1x8x128xf32> to vector<8x128xf32>
    %314 = vector.shape_cast %310 : vector<8x128xf32> to vector<1x8x128xf32>
    tpu.vector_store %arg8[%311, %c0_78, %c0_79], %314 {strides = array<i32>} : memref<8x8x128xf32, #tpu.memory_space<vmem>>, vector<1x8x128xf32>,
    %c4_i32 = arith.constant 4 : i32
    %cst_80 = arith.constant dense<0.000000e+00> : vector<8xf32>
    %315 = vector.multi_reduction <add>, %310, %cst_80 [1] : vector<8x128xf32> to vector<8xf32>
    %316 = vector.shape_cast %315 : vector<8xf32> to vector<8x1xf32>
    %cst_81 = arith.constant 1.280000e+02 : f32
    %317 = vector.broadcast %cst_81 : f32 to vector<8x1xf32>
    %318 = arith.divf %316, %317 : vector<8x1xf32>
    %319 = arith.mulf %310, %310 : vector<8x128xf32>
    %cst_82 = arith.constant dense<0.000000e+00> : vector<8xf32>
    %320 = vector.multi_reduction <add>, %319, %cst_82 [1] : vector<8x128xf32> to vector<8xf32>
    %321 = vector.shape_cast %320 : vector<8xf32> to vector<8x1xf32>
    %cst_83 = arith.constant 1.280000e+02 : f32
    %322 = vector.broadcast %cst_83 : f32 to vector<8x1xf32>
    %323 = arith.divf %321, %322 : vector<8x1xf32>
    %324 = arith.mulf %318, %318 : vector<8x1xf32>
    %325 = arith.subf %323, %324 : vector<8x1xf32>
    %326 = vector.broadcast %318 : vector<8x1xf32> to vector<8x128xf32>
    %327 = arith.subf %310, %326 : vector<8x128xf32>
    %cst_84 = arith.constant 9.99999974E-6 : f32
    %328 = vector.broadcast %cst_84 : f32 to vector<8x1xf32>
    %329 = arith.addf %325, %328 : vector<8x1xf32>
    %330 = math.rsqrt %329 : vector<8x1xf32>
    %331 = vector.broadcast %330 : vector<8x1xf32> to vector<8x128xf32>
    %332 = arith.mulf %327, %331 : vector<8x128xf32>
    %333 = vector.broadcast %5 : vector<1x128xf32> to vector<8x128xf32>
    %334 = arith.mulf %332, %333 : vector<8x128xf32>
    %335 = vector.broadcast %6 : vector<1x128xf32> to vector<8x128xf32>
    %336 = arith.addf %334, %335 : vector<8x128xf32>
    %cst_85 = arith.constant dense<0.000000e+00> : vector<8xf32>
    %337 = vector.multi_reduction <add>, %308, %cst_85 [1] : vector<8x128xf32> to vector<8xf32>
    %338 = vector.shape_cast %337 : vector<8xf32> to vector<8x1xf32>
    %cst_86 = arith.constant 1.280000e+02 : f32
    %339 = vector.broadcast %cst_86 : f32 to vector<8x1xf32>
    %340 = arith.divf %338, %339 : vector<8x1xf32>
    %341 = arith.mulf %308, %308 : vector<8x128xf32>
    %cst_87 = arith.constant dense<0.000000e+00> : vector<8xf32>
    %342 = vector.multi_reduction <add>, %341, %cst_87 [1] : vector<8x128xf32> to vector<8xf32>
    %343 = vector.shape_cast %342 : vector<8xf32> to vector<8x1xf32>
    %cst_88 = arith.constant 1.280000e+02 : f32
    %344 = vector.broadcast %cst_88 : f32 to vector<8x1xf32>
    %345 = arith.divf %343, %344 : vector<8x1xf32>
    %346 = arith.mulf %340, %340 : vector<8x1xf32>
    %347 = arith.subf %345, %346 : vector<8x1xf32>
    %348 = vector.broadcast %340 : vector<8x1xf32> to vector<8x128xf32>
    %349 = arith.subf %308, %348 : vector<8x128xf32>
    %cst_89 = arith.constant 9.99999974E-6 : f32
    %350 = vector.broadcast %cst_89 : f32 to vector<8x1xf32>
    %351 = arith.addf %347, %350 : vector<8x1xf32>
    %352 = math.rsqrt %351 : vector<8x1xf32>
    %353 = vector.broadcast %352 : vector<8x1xf32> to vector<8x128xf32>
    %354 = arith.mulf %349, %353 : vector<8x128xf32>
    %355 = vector.broadcast %7 : vector<1x128xf32> to vector<8x128xf32>
    %356 = arith.mulf %354, %355 : vector<8x128xf32>
    %357 = vector.broadcast %8 : vector<1x128xf32> to vector<8x128xf32>
    %358 = arith.addf %356, %357 : vector<8x128xf32>
    %359 = arith.truncf %336 : vector<8x128xf32> to vector<8x128xbf16>
    %cst_90 = arith.constant dense<0.000000e+00> : vector<8x512xf32>
    %360 = tpu.matmul %359, %4, %cst_90 {dimension_numbers = #tpu.dot_dimension_numbers<[1], [0], [0], [1], [0, 0, 1, 1], [], []>} : vector<8x128xbf16>, vector<128x512xbf16>, vector<8x512xf32> -> vector<8x512xf32>
    %361 = arith.addf %3, %360 : vector<8x512xf32>
    %362 = vector.extract_strided_slice %361 {offsets = [0, 0], sizes = [8, 128], strides = [1, 1]} : vector<8x512xf32> to vector<8x128xf32>
    %363 = arith.negf %362 : vector<8x128xf32>
    %364 = math.exp %363 : vector<8x128xf32>
    %cst_91 = arith.constant 1.000000e+00 : f32
    %365 = vector.broadcast %cst_91 : f32 to vector<8x128xf32>
    %366 = arith.addf %365, %364 : vector<8x128xf32>
    %367 = arith.divf %365, %366 : vector<8x128xf32>
    %368 = vector.extract_strided_slice %361 {offsets = [0, 128], sizes = [8, 128], strides = [1, 1]} : vector<8x512xf32> to vector<8x128xf32>
    %369 = arith.negf %368 : vector<8x128xf32>
    %370 = math.exp %369 : vector<8x128xf32>
    %cst_92 = arith.constant 1.000000e+00 : f32
    %371 = vector.broadcast %cst_92 : f32 to vector<8x128xf32>
    %372 = arith.addf %371, %370 : vector<8x128xf32>
    %373 = arith.divf %371, %372 : vector<8x128xf32>
    %374 = vector.extract_strided_slice %361 {offsets = [0, 256], sizes = [8, 128], strides = [1, 1]} : vector<8x512xf32> to vector<8x128xf32>
    %375 = math.tanh %374 : vector<8x128xf32>
    %376 = vector.extract_strided_slice %361 {offsets = [0, 384], sizes = [8, 128], strides = [1, 1]} : vector<8x512xf32> to vector<8x128xf32>
    %377 = arith.negf %376 : vector<8x128xf32>
    %378 = math.exp %377 : vector<8x128xf32>
    %cst_93 = arith.constant 1.000000e+00 : f32
    %379 = vector.broadcast %cst_93 : f32 to vector<8x128xf32>
    %380 = arith.addf %379, %378 : vector<8x128xf32>
    %381 = arith.divf %379, %380 : vector<8x128xf32>
    %382 = arith.mulf %373, %358 : vector<8x128xf32>
    %383 = arith.mulf %367, %375 : vector<8x128xf32>
    %384 = arith.addf %382, %383 : vector<8x128xf32>
    %385 = math.tanh %384 : vector<8x128xf32>
    %386 = arith.mulf %381, %385 : vector<8x128xf32>
    %387 = arith.index_cast %c4_i32 : i32 to index
    %c0_94 = arith.constant 0 : index
    %c0_95 = arith.constant 0 : index
    %388 = vector.load %arg8[%387, %c0_94, %c0_95] : memref<8x8x128xf32, #tpu.memory_space<vmem>>, vector<1x8x128xf32>
    %389 = vector.shape_cast %388 : vector<1x8x128xf32> to vector<8x128xf32>
    %390 = vector.shape_cast %386 : vector<8x128xf32> to vector<1x8x128xf32>
    tpu.vector_store %arg8[%387, %c0_94, %c0_95], %390 {strides = array<i32>} : memref<8x8x128xf32, #tpu.memory_space<vmem>>, vector<1x8x128xf32>,
    %c5_i32 = arith.constant 5 : i32
    %cst_96 = arith.constant dense<0.000000e+00> : vector<8xf32>
    %391 = vector.multi_reduction <add>, %386, %cst_96 [1] : vector<8x128xf32> to vector<8xf32>
    %392 = vector.shape_cast %391 : vector<8xf32> to vector<8x1xf32>
    %cst_97 = arith.constant 1.280000e+02 : f32
    %393 = vector.broadcast %cst_97 : f32 to vector<8x1xf32>
    %394 = arith.divf %392, %393 : vector<8x1xf32>
    %395 = arith.mulf %386, %386 : vector<8x128xf32>
    %cst_98 = arith.constant dense<0.000000e+00> : vector<8xf32>
    %396 = vector.multi_reduction <add>, %395, %cst_98 [1] : vector<8x128xf32> to vector<8xf32>
    %397 = vector.shape_cast %396 : vector<8xf32> to vector<8x1xf32>
    %cst_99 = arith.constant 1.280000e+02 : f32
    %398 = vector.broadcast %cst_99 : f32 to vector<8x1xf32>
    %399 = arith.divf %397, %398 : vector<8x1xf32>
    %400 = arith.mulf %394, %394 : vector<8x1xf32>
    %401 = arith.subf %399, %400 : vector<8x1xf32>
    %402 = vector.broadcast %394 : vector<8x1xf32> to vector<8x128xf32>
    %403 = arith.subf %386, %402 : vector<8x128xf32>
    %cst_100 = arith.constant 9.99999974E-6 : f32
    %404 = vector.broadcast %cst_100 : f32 to vector<8x1xf32>
    %405 = arith.addf %401, %404 : vector<8x1xf32>
    %406 = math.rsqrt %405 : vector<8x1xf32>
    %407 = vector.broadcast %406 : vector<8x1xf32> to vector<8x128xf32>
    %408 = arith.mulf %403, %407 : vector<8x128xf32>
    %409 = vector.broadcast %5 : vector<1x128xf32> to vector<8x128xf32>
    %410 = arith.mulf %408, %409 : vector<8x128xf32>
    %411 = vector.broadcast %6 : vector<1x128xf32> to vector<8x128xf32>
    %412 = arith.addf %410, %411 : vector<8x128xf32>
    %cst_101 = arith.constant dense<0.000000e+00> : vector<8xf32>
    %413 = vector.multi_reduction <add>, %384, %cst_101 [1] : vector<8x128xf32> to vector<8xf32>
    %414 = vector.shape_cast %413 : vector<8xf32> to vector<8x1xf32>
    %cst_102 = arith.constant 1.280000e+02 : f32
    %415 = vector.broadcast %cst_102 : f32 to vector<8x1xf32>
    %416 = arith.divf %414, %415 : vector<8x1xf32>
    %417 = arith.mulf %384, %384 : vector<8x128xf32>
    %cst_103 = arith.constant dense<0.000000e+00> : vector<8xf32>
    %418 = vector.multi_reduction <add>, %417, %cst_103 [1] : vector<8x128xf32> to vector<8xf32>
    %419 = vector.shape_cast %418 : vector<8xf32> to vector<8x1xf32>
    %cst_104 = arith.constant 1.280000e+02 : f32
    %420 = vector.broadcast %cst_104 : f32 to vector<8x1xf32>
    %421 = arith.divf %419, %420 : vector<8x1xf32>
    %422 = arith.mulf %416, %416 : vector<8x1xf32>
    %423 = arith.subf %421, %422 : vector<8x1xf32>
    %424 = vector.broadcast %416 : vector<8x1xf32> to vector<8x128xf32>
    %425 = arith.subf %384, %424 : vector<8x128xf32>
    %cst_105 = arith.constant 9.99999974E-6 : f32
    %426 = vector.broadcast %cst_105 : f32 to vector<8x1xf32>
    %427 = arith.addf %423, %426 : vector<8x1xf32>
    %428 = math.rsqrt %427 : vector<8x1xf32>
    %429 = vector.broadcast %428 : vector<8x1xf32> to vector<8x128xf32>
    %430 = arith.mulf %425, %429 : vector<8x128xf32>
    %431 = vector.broadcast %7 : vector<1x128xf32> to vector<8x128xf32>
    %432 = arith.mulf %430, %431 : vector<8x128xf32>
    %433 = vector.broadcast %8 : vector<1x128xf32> to vector<8x128xf32>
    %434 = arith.addf %432, %433 : vector<8x128xf32>
    %435 = arith.truncf %412 : vector<8x128xf32> to vector<8x128xbf16>
    %cst_106 = arith.constant dense<0.000000e+00> : vector<8x512xf32>
    %436 = tpu.matmul %435, %4, %cst_106 {dimension_numbers = #tpu.dot_dimension_numbers<[1], [0], [0], [1], [0, 0, 1, 1], [], []>} : vector<8x128xbf16>, vector<128x512xbf16>, vector<8x512xf32> -> vector<8x512xf32>
    %437 = arith.addf %3, %436 : vector<8x512xf32>
    %438 = vector.extract_strided_slice %437 {offsets = [0, 0], sizes = [8, 128], strides = [1, 1]} : vector<8x512xf32> to vector<8x128xf32>
    %439 = arith.negf %438 : vector<8x128xf32>
    %440 = math.exp %439 : vector<8x128xf32>
    %cst_107 = arith.constant 1.000000e+00 : f32
    %441 = vector.broadcast %cst_107 : f32 to vector<8x128xf32>
    %442 = arith.addf %441, %440 : vector<8x128xf32>
    %443 = arith.divf %441, %442 : vector<8x128xf32>
    %444 = vector.extract_strided_slice %437 {offsets = [0, 128], sizes = [8, 128], strides = [1, 1]} : vector<8x512xf32> to vector<8x128xf32>
    %445 = arith.negf %444 : vector<8x128xf32>
    %446 = math.exp %445 : vector<8x128xf32>
    %cst_108 = arith.constant 1.000000e+00 : f32
    %447 = vector.broadcast %cst_108 : f32 to vector<8x128xf32>
    %448 = arith.addf %447, %446 : vector<8x128xf32>
    %449 = arith.divf %447, %448 : vector<8x128xf32>
    %450 = vector.extract_strided_slice %437 {offsets = [0, 256], sizes = [8, 128], strides = [1, 1]} : vector<8x512xf32> to vector<8x128xf32>
    %451 = math.tanh %450 : vector<8x128xf32>
    %452 = vector.extract_strided_slice %437 {offsets = [0, 384], sizes = [8, 128], strides = [1, 1]} : vector<8x512xf32> to vector<8x128xf32>
    %453 = arith.negf %452 : vector<8x128xf32>
    %454 = math.exp %453 : vector<8x128xf32>
    %cst_109 = arith.constant 1.000000e+00 : f32
    %455 = vector.broadcast %cst_109 : f32 to vector<8x128xf32>
    %456 = arith.addf %455, %454 : vector<8x128xf32>
    %457 = arith.divf %455, %456 : vector<8x128xf32>
    %458 = arith.mulf %449, %434 : vector<8x128xf32>
    %459 = arith.mulf %443, %451 : vector<8x128xf32>
    %460 = arith.addf %458, %459 : vector<8x128xf32>
    %461 = math.tanh %460 : vector<8x128xf32>
    %462 = arith.mulf %457, %461 : vector<8x128xf32>
    %463 = arith.index_cast %c5_i32 : i32 to index
    %c0_110 = arith.constant 0 : index
    %c0_111 = arith.constant 0 : index
    %464 = vector.load %arg8[%463, %c0_110, %c0_111] : memref<8x8x128xf32, #tpu.memory_space<vmem>>, vector<1x8x128xf32>
    %465 = vector.shape_cast %464 : vector<1x8x128xf32> to vector<8x128xf32>
    %466 = vector.shape_cast %462 : vector<8x128xf32> to vector<1x8x128xf32>
    tpu.vector_store %arg8[%463, %c0_110, %c0_111], %466 {strides = array<i32>} : memref<8x8x128xf32, #tpu.memory_space<vmem>>, vector<1x8x128xf32>,
    %c6_i32 = arith.constant 6 : i32
    %cst_112 = arith.constant dense<0.000000e+00> : vector<8xf32>
    %467 = vector.multi_reduction <add>, %462, %cst_112 [1] : vector<8x128xf32> to vector<8xf32>
    %468 = vector.shape_cast %467 : vector<8xf32> to vector<8x1xf32>
    %cst_113 = arith.constant 1.280000e+02 : f32
    %469 = vector.broadcast %cst_113 : f32 to vector<8x1xf32>
    %470 = arith.divf %468, %469 : vector<8x1xf32>
    %471 = arith.mulf %462, %462 : vector<8x128xf32>
    %cst_114 = arith.constant dense<0.000000e+00> : vector<8xf32>
    %472 = vector.multi_reduction <add>, %471, %cst_114 [1] : vector<8x128xf32> to vector<8xf32>
    %473 = vector.shape_cast %472 : vector<8xf32> to vector<8x1xf32>
    %cst_115 = arith.constant 1.280000e+02 : f32
    %474 = vector.broadcast %cst_115 : f32 to vector<8x1xf32>
    %475 = arith.divf %473, %474 : vector<8x1xf32>
    %476 = arith.mulf %470, %470 : vector<8x1xf32>
    %477 = arith.subf %475, %476 : vector<8x1xf32>
    %478 = vector.broadcast %470 : vector<8x1xf32> to vector<8x128xf32>
    %479 = arith.subf %462, %478 : vector<8x128xf32>
    %cst_116 = arith.constant 9.99999974E-6 : f32
    %480 = vector.broadcast %cst_116 : f32 to vector<8x1xf32>
    %481 = arith.addf %477, %480 : vector<8x1xf32>
    %482 = math.rsqrt %481 : vector<8x1xf32>
    %483 = vector.broadcast %482 : vector<8x1xf32> to vector<8x128xf32>
    %484 = arith.mulf %479, %483 : vector<8x128xf32>
    %485 = vector.broadcast %5 : vector<1x128xf32> to vector<8x128xf32>
    %486 = arith.mulf %484, %485 : vector<8x128xf32>
    %487 = vector.broadcast %6 : vector<1x128xf32> to vector<8x128xf32>
    %488 = arith.addf %486, %487 : vector<8x128xf32>
    %cst_117 = arith.constant dense<0.000000e+00> : vector<8xf32>
    %489 = vector.multi_reduction <add>, %460, %cst_117 [1] : vector<8x128xf32> to vector<8xf32>
    %490 = vector.shape_cast %489 : vector<8xf32> to vector<8x1xf32>
    %cst_118 = arith.constant 1.280000e+02 : f32
    %491 = vector.broadcast %cst_118 : f32 to vector<8x1xf32>
    %492 = arith.divf %490, %491 : vector<8x1xf32>
    %493 = arith.mulf %460, %460 : vector<8x128xf32>
    %cst_119 = arith.constant dense<0.000000e+00> : vector<8xf32>
    %494 = vector.multi_reduction <add>, %493, %cst_119 [1] : vector<8x128xf32> to vector<8xf32>
    %495 = vector.shape_cast %494 : vector<8xf32> to vector<8x1xf32>
    %cst_120 = arith.constant 1.280000e+02 : f32
    %496 = vector.broadcast %cst_120 : f32 to vector<8x1xf32>
    %497 = arith.divf %495, %496 : vector<8x1xf32>
    %498 = arith.mulf %492, %492 : vector<8x1xf32>
    %499 = arith.subf %497, %498 : vector<8x1xf32>
    %500 = vector.broadcast %492 : vector<8x1xf32> to vector<8x128xf32>
    %501 = arith.subf %460, %500 : vector<8x128xf32>
    %cst_121 = arith.constant 9.99999974E-6 : f32
    %502 = vector.broadcast %cst_121 : f32 to vector<8x1xf32>
    %503 = arith.addf %499, %502 : vector<8x1xf32>
    %504 = math.rsqrt %503 : vector<8x1xf32>
    %505 = vector.broadcast %504 : vector<8x1xf32> to vector<8x128xf32>
    %506 = arith.mulf %501, %505 : vector<8x128xf32>
    %507 = vector.broadcast %7 : vector<1x128xf32> to vector<8x128xf32>
    %508 = arith.mulf %506, %507 : vector<8x128xf32>
    %509 = vector.broadcast %8 : vector<1x128xf32> to vector<8x128xf32>
    %510 = arith.addf %508, %509 : vector<8x128xf32>
    %511 = arith.truncf %488 : vector<8x128xf32> to vector<8x128xbf16>
    %cst_122 = arith.constant dense<0.000000e+00> : vector<8x512xf32>
    %512 = tpu.matmul %511, %4, %cst_122 {dimension_numbers = #tpu.dot_dimension_numbers<[1], [0], [0], [1], [0, 0, 1, 1], [], []>} : vector<8x128xbf16>, vector<128x512xbf16>, vector<8x512xf32> -> vector<8x512xf32>
    %513 = arith.addf %3, %512 : vector<8x512xf32>
    %514 = vector.extract_strided_slice %513 {offsets = [0, 0], sizes = [8, 128], strides = [1, 1]} : vector<8x512xf32> to vector<8x128xf32>
    %515 = arith.negf %514 : vector<8x128xf32>
    %516 = math.exp %515 : vector<8x128xf32>
    %cst_123 = arith.constant 1.000000e+00 : f32
    %517 = vector.broadcast %cst_123 : f32 to vector<8x128xf32>
    %518 = arith.addf %517, %516 : vector<8x128xf32>
    %519 = arith.divf %517, %518 : vector<8x128xf32>
    %520 = vector.extract_strided_slice %513 {offsets = [0, 128], sizes = [8, 128], strides = [1, 1]} : vector<8x512xf32> to vector<8x128xf32>
    %521 = arith.negf %520 : vector<8x128xf32>
    %522 = math.exp %521 : vector<8x128xf32>
    %cst_124 = arith.constant 1.000000e+00 : f32
    %523 = vector.broadcast %cst_124 : f32 to vector<8x128xf32>
    %524 = arith.addf %523, %522 : vector<8x128xf32>
    %525 = arith.divf %523, %524 : vector<8x128xf32>
    %526 = vector.extract_strided_slice %513 {offsets = [0, 256], sizes = [8, 128], strides = [1, 1]} : vector<8x512xf32> to vector<8x128xf32>
    %527 = math.tanh %526 : vector<8x128xf32>
    %528 = vector.extract_strided_slice %513 {offsets = [0, 384], sizes = [8, 128], strides = [1, 1]} : vector<8x512xf32> to vector<8x128xf32>
    %529 = arith.negf %528 : vector<8x128xf32>
    %530 = math.exp %529 : vector<8x128xf32>
    %cst_125 = arith.constant 1.000000e+00 : f32
    %531 = vector.broadcast %cst_125 : f32 to vector<8x128xf32>
    %532 = arith.addf %531, %530 : vector<8x128xf32>
    %533 = arith.divf %531, %532 : vector<8x128xf32>
    %534 = arith.mulf %525, %510 : vector<8x128xf32>
    %535 = arith.mulf %519, %527 : vector<8x128xf32>
    %536 = arith.addf %534, %535 : vector<8x128xf32>
    %537 = math.tanh %536 : vector<8x128xf32>
    %538 = arith.mulf %533, %537 : vector<8x128xf32>
    %539 = arith.index_cast %c6_i32 : i32 to index
    %c0_126 = arith.constant 0 : index
    %c0_127 = arith.constant 0 : index
    %540 = vector.load %arg8[%539, %c0_126, %c0_127] : memref<8x8x128xf32, #tpu.memory_space<vmem>>, vector<1x8x128xf32>
    %541 = vector.shape_cast %540 : vector<1x8x128xf32> to vector<8x128xf32>
    %542 = vector.shape_cast %538 : vector<8x128xf32> to vector<1x8x128xf32>
    tpu.vector_store %arg8[%539, %c0_126, %c0_127], %542 {strides = array<i32>} : memref<8x8x128xf32, #tpu.memory_space<vmem>>, vector<1x8x128xf32>,
    %c7_i32 = arith.constant 7 : i32
    %cst_128 = arith.constant dense<0.000000e+00> : vector<8xf32>
    %543 = vector.multi_reduction <add>, %538, %cst_128 [1] : vector<8x128xf32> to vector<8xf32>
    %544 = vector.shape_cast %543 : vector<8xf32> to vector<8x1xf32>
    %cst_129 = arith.constant 1.280000e+02 : f32
    %545 = vector.broadcast %cst_129 : f32 to vector<8x1xf32>
    %546 = arith.divf %544, %545 : vector<8x1xf32>
    %547 = arith.mulf %538, %538 : vector<8x128xf32>
    %cst_130 = arith.constant dense<0.000000e+00> : vector<8xf32>
    %548 = vector.multi_reduction <add>, %547, %cst_130 [1] : vector<8x128xf32> to vector<8xf32>
    %549 = vector.shape_cast %548 : vector<8xf32> to vector<8x1xf32>
    %cst_131 = arith.constant 1.280000e+02 : f32
    %550 = vector.broadcast %cst_131 : f32 to vector<8x1xf32>
    %551 = arith.divf %549, %550 : vector<8x1xf32>
    %552 = arith.mulf %546, %546 : vector<8x1xf32>
    %553 = arith.subf %551, %552 : vector<8x1xf32>
    %554 = vector.broadcast %546 : vector<8x1xf32> to vector<8x128xf32>
    %555 = arith.subf %538, %554 : vector<8x128xf32>
    %cst_132 = arith.constant 9.99999974E-6 : f32
    %556 = vector.broadcast %cst_132 : f32 to vector<8x1xf32>
    %557 = arith.addf %553, %556 : vector<8x1xf32>
    %558 = math.rsqrt %557 : vector<8x1xf32>
    %559 = vector.broadcast %558 : vector<8x1xf32> to vector<8x128xf32>
    %560 = arith.mulf %555, %559 : vector<8x128xf32>
    %561 = vector.broadcast %5 : vector<1x128xf32> to vector<8x128xf32>
    %562 = arith.mulf %560, %561 : vector<8x128xf32>
    %563 = vector.broadcast %6 : vector<1x128xf32> to vector<8x128xf32>
    %564 = arith.addf %562, %563 : vector<8x128xf32>
    %cst_133 = arith.constant dense<0.000000e+00> : vector<8xf32>
    %565 = vector.multi_reduction <add>, %536, %cst_133 [1] : vector<8x128xf32> to vector<8xf32>
    %566 = vector.shape_cast %565 : vector<8xf32> to vector<8x1xf32>
    %cst_134 = arith.constant 1.280000e+02 : f32
    %567 = vector.broadcast %cst_134 : f32 to vector<8x1xf32>
    %568 = arith.divf %566, %567 : vector<8x1xf32>
    %569 = arith.mulf %536, %536 : vector<8x128xf32>
    %cst_135 = arith.constant dense<0.000000e+00> : vector<8xf32>
    %570 = vector.multi_reduction <add>, %569, %cst_135 [1] : vector<8x128xf32> to vector<8xf32>
    %571 = vector.shape_cast %570 : vector<8xf32> to vector<8x1xf32>
    %cst_136 = arith.constant 1.280000e+02 : f32
    %572 = vector.broadcast %cst_136 : f32 to vector<8x1xf32>
    %573 = arith.divf %571, %572 : vector<8x1xf32>
    %574 = arith.mulf %568, %568 : vector<8x1xf32>
    %575 = arith.subf %573, %574 : vector<8x1xf32>
    %576 = vector.broadcast %568 : vector<8x1xf32> to vector<8x128xf32>
    %577 = arith.subf %536, %576 : vector<8x128xf32>
    %cst_137 = arith.constant 9.99999974E-6 : f32
    %578 = vector.broadcast %cst_137 : f32 to vector<8x1xf32>
    %579 = arith.addf %575, %578 : vector<8x1xf32>
    %580 = math.rsqrt %579 : vector<8x1xf32>
    %581 = vector.broadcast %580 : vector<8x1xf32> to vector<8x128xf32>
    %582 = arith.mulf %577, %581 : vector<8x128xf32>
    %583 = vector.broadcast %7 : vector<1x128xf32> to vector<8x128xf32>
    %584 = arith.mulf %582, %583 : vector<8x128xf32>
    %585 = vector.broadcast %8 : vector<1x128xf32> to vector<8x128xf32>
    %586 = arith.addf %584, %585 : vector<8x128xf32>
    %587 = arith.truncf %564 : vector<8x128xf32> to vector<8x128xbf16>
    %cst_138 = arith.constant dense<0.000000e+00> : vector<8x512xf32>
    %588 = tpu.matmul %587, %4, %cst_138 {dimension_numbers = #tpu.dot_dimension_numbers<[1], [0], [0], [1], [0, 0, 1, 1], [], []>} : vector<8x128xbf16>, vector<128x512xbf16>, vector<8x512xf32> -> vector<8x512xf32>
    %589 = arith.addf %3, %588 : vector<8x512xf32>
    %590 = vector.extract_strided_slice %589 {offsets = [0, 0], sizes = [8, 128], strides = [1, 1]} : vector<8x512xf32> to vector<8x128xf32>
    %591 = arith.negf %590 : vector<8x128xf32>
    %592 = math.exp %591 : vector<8x128xf32>
    %cst_139 = arith.constant 1.000000e+00 : f32
    %593 = vector.broadcast %cst_139 : f32 to vector<8x128xf32>
    %594 = arith.addf %593, %592 : vector<8x128xf32>
    %595 = arith.divf %593, %594 : vector<8x128xf32>
    %596 = vector.extract_strided_slice %589 {offsets = [0, 128], sizes = [8, 128], strides = [1, 1]} : vector<8x512xf32> to vector<8x128xf32>
    %597 = arith.negf %596 : vector<8x128xf32>
    %598 = math.exp %597 : vector<8x128xf32>
    %cst_140 = arith.constant 1.000000e+00 : f32
    %599 = vector.broadcast %cst_140 : f32 to vector<8x128xf32>
    %600 = arith.addf %599, %598 : vector<8x128xf32>
    %601 = arith.divf %599, %600 : vector<8x128xf32>
    %602 = vector.extract_strided_slice %589 {offsets = [0, 256], sizes = [8, 128], strides = [1, 1]} : vector<8x512xf32> to vector<8x128xf32>
    %603 = math.tanh %602 : vector<8x128xf32>
    %604 = vector.extract_strided_slice %589 {offsets = [0, 384], sizes = [8, 128], strides = [1, 1]} : vector<8x512xf32> to vector<8x128xf32>
    %605 = arith.negf %604 : vector<8x128xf32>
    %606 = math.exp %605 : vector<8x128xf32>
    %cst_141 = arith.constant 1.000000e+00 : f32
    %607 = vector.broadcast %cst_141 : f32 to vector<8x128xf32>
    %608 = arith.addf %607, %606 : vector<8x128xf32>
    %609 = arith.divf %607, %608 : vector<8x128xf32>
    %610 = arith.mulf %601, %586 : vector<8x128xf32>
    %611 = arith.mulf %595, %603 : vector<8x128xf32>
    %612 = arith.addf %610, %611 : vector<8x128xf32>
    %613 = math.tanh %612 : vector<8x128xf32>
    %614 = arith.mulf %609, %613 : vector<8x128xf32>
    %615 = arith.index_cast %c7_i32 : i32 to index
    %c0_142 = arith.constant 0 : index
    %c0_143 = arith.constant 0 : index
    %616 = vector.load %arg8[%615, %c0_142, %c0_143] : memref<8x8x128xf32, #tpu.memory_space<vmem>>, vector<1x8x128xf32>
    %617 = vector.shape_cast %616 : vector<1x8x128xf32> to vector<8x128xf32>
    %618 = vector.shape_cast %614 : vector<8x128xf32> to vector<1x8x128xf32>
    tpu.vector_store %arg8[%615, %c0_142, %c0_143], %618 {strides = array<i32>} : memref<8x8x128xf32, #tpu.memory_space<vmem>>, vector<1x8x128xf32>,
    %c8_i32 = arith.constant 8 : i32
    %c0_144 = arith.constant 0 : index
    %c0_145 = arith.constant 0 : index
    %619 = vector.load %arg9[%c0_144, %c0_145] : memref<8x128xf32, #tpu.memory_space<vmem>>, vector<8x128xf32>
    tpu.vector_store %arg9[%c0_144, %c0_145], %614 {strides = array<i32>} : memref<8x128xf32, #tpu.memory_space<vmem>>, vector<8x128xf32>,
    %c0_146 = arith.constant 0 : index
    %c0_147 = arith.constant 0 : index
    %620 = vector.load %arg10[%c0_146, %c0_147] : memref<8x128xf32, #tpu.memory_space<vmem>>, vector<8x128xf32>
    tpu.vector_store %arg10[%c0_146, %c0_147], %612 {strides = array<i32>} : memref<8x128xf32, #tpu.memory_space<vmem>>, vector<8x128xf32>,
    return
  }
  func.func @transform_0(%arg0: i32, %arg1: i32) -> (i32, i32) {
    %c0_i32 = arith.constant 0 : i32
    %c0_i32_0 = arith.constant 0 : i32
    return %arg0, %c0_i32 : i32, i32
  }
  func.func @transform_1(%arg0: i32, %arg1: i32) -> (i32, i32) {
    %c0_i32 = arith.constant 0 : i32
    %c0_i32_0 = arith.constant 0 : i32
    %c0_i32_1 = arith.constant 0 : i32
    return %c0_i32, %c0_i32_0 : i32, i32
  }
  func.func @transform_2(%arg0: i32, %arg1: i32) -> (i32, i32) {
    %c0_i32 = arith.constant 0 : i32
    %c0_i32_0 = arith.constant 0 : i32
    %c0_i32_1 = arith.constant 0 : i32
    return %c0_i32, %c0_i32_0 : i32, i32
  }
  func.func @transform_3(%arg0: i32, %arg1: i32) -> (i32, i32) {
    %c0_i32 = arith.constant 0 : i32
    %c0_i32_0 = arith.constant 0 : i32
    %c0_i32_1 = arith.constant 0 : i32
    return %c0_i32, %c0_i32_0 : i32, i32
  }
  func.func @transform_4(%arg0: i32, %arg1: i32) -> (i32, i32) {
    %c0_i32 = arith.constant 0 : i32
    %c0_i32_0 = arith.constant 0 : i32
    %c0_i32_1 = arith.constant 0 : i32
    return %c0_i32, %c0_i32_0 : i32, i32
  }
  func.func @transform_5(%arg0: i32, %arg1: i32) -> (i32, i32) {
    %c0_i32 = arith.constant 0 : i32
    %c0_i32_0 = arith.constant 0 : i32
    %c0_i32_1 = arith.constant 0 : i32
    return %c0_i32, %c0_i32_0 : i32, i32
  }
  func.func @transform_6(%arg0: i32, %arg1: i32) -> (i32, i32, i32) {
    %c0_i32 = arith.constant 0 : i32
    %c0_i32_0 = arith.constant 0 : i32
    return %arg1, %arg0, %c0_i32 : i32, i32, i32
  }
}

</mosaic_0001>

<llo_original>
// kernel: tpu_custom_call.1
$region0: #{tpu_custom_call.1}
  #allocation0 [shape = 'u32[]', space=smem, size = 0x4, offset = 0x4, fixed_abs, tag = 'smem constant byte address 0x4 - core index']
  #allocation1 [shape = 'u32[144,128]{1,0:T(1,128)}', space=vmem, size = 0x12000, scoped, tag = 'internal scratch']
  #allocation2 [shape = 'f32[8,128]{1,0:T(8,128)}', space=vmem, size = 0x1000, scoped, tag = 'scratch operand']
  #allocation3 [shape = 'f32[8,128]{1,0:T(8,128)}', space=vmem, size = 0x1000, scoped, tag = 'scratch operand']
  %s0 = inlined_call_operand.hbm [shape: f32[8,512], index: 0, kind: input, shape index: {}]
  %s1 = inlined_call_operand.hbm [shape: bf16[128,512], index: 1, kind: input, shape index: {}]
  %s2 = inlined_call_operand.vmem [shape: f32[1,128], index: 2, kind: input, shape index: {}]
  %s3 = inlined_call_operand.vmem [shape: f32[1,128], index: 3, kind: input, shape index: {}]
  %s4 = inlined_call_operand.vmem [shape: f32[1,128], index: 4, kind: input, shape index: {}]
  %s5 = inlined_call_operand.vmem [shape: f32[1,128], index: 5, kind: input, shape index: {}]
  %s6 = inlined_call_operand.hbm [shape: f32[16,8,128], index: 6, kind: output, shape index: {}]
  %s7 = sld [smem:[#allocation0]]
  $region69: #{tpu_custom_call.1} parent=0
    _
  %s9 = ssub.s32 1, %s7
  %s10 = scalar_select 0, %s9, %s7
  $region1: #{tpu_custom_call.1} parent=0
    #allocation4 [shape = 'u8[16384]{0}', space=vmem, size = 0x4000, scoped, tag = 'input window, operand 0, single buffered']
    #allocation5 [shape = 's32[2]{0}', space=sflag, size = 0x8, scoped, tag = 'scoped memory for tpu_custom_call.1']
    #allocation6 [shape = 's32[2]{0}', space=sflag, size = 0x8, scoped, tag = 'scoped memory for tpu_custom_call.1']
    #allocation7 [shape = 'u8[131072]{0}', space=vmem, size = 0x20000, scoped, tag = 'input window, operand 1, single buffered']
    #allocation8 [shape = 's32[1]{0}', space=sflag, size = 0x4, scoped, tag = 'scoped memory for tpu_custom_call.1']
    #allocation9 [shape = 'u8[65536]{0}', space=vmem, size = 0x10000, scoped, tag = 'output window, operand 0']
    %11 = vsyncpa [#allocation5], 0
    %12 = vsyncpa [#allocation8], 0
    %13 = vsyncpa [#allocation6], 0
    %s14 = scalar_lea.sflag [#allocation6], 1
    %15 = vsyncpa %s14, 0
    loop: start=0, step=1, limit=4
    $region2: #{tpu_custom_call.1} parent=1 // loop_pre_header
      _
    $region3: #{tpu_custom_call.1} parent=1 // loop_header
      %s17 = sphi 0, %s21
      %p18 = scmp.ge.s32.totalorder %s17, 4
      %s24 = sphi 0, %s36
      %s25 = sphi 0, %s32
      %s26 = sphi 0, %s24
      %s27 = sphi 0, %s25
      %s28 = sphi 0, %s26
      %s29 = sphi 0, %s27
      %s39 = sphi 0, %s41
      %s42 = sphi 0, %s39
      %s43 = sphi 0, %s42
      %s59 = sphi 0, %s43
      %s63 = sphi 0, %s63
      %s65 = sphi 0, %s63
      %s66 = sphi 0, %s65
      %s80 = sphi 0, %s66
      %s84 = sphi 0, %s84
      %s86 = sphi 0, %s84
      %s87 = sphi 0, %s86
      %s101 = sphi 0, %s87
      %s105 = sphi 0, %s105
      %s107 = sphi 0, %s105
      %s108 = sphi 0, %s107
      %s122 = sphi 0, %s108
      %s126 = sphi 0, %s126
      %s128 = sphi 0, %s126
      %s129 = sphi 0, %s128
      %s143 = sphi 0, %s129
      %s147 = sphi 0, %s147
      %s149 = sphi 0, %s147
      %s150 = sphi 0, %s149
      %s164 = sphi 0, %s150
      %s172 = sphi 0, %s174
      %s175 = sphi 0, %s172
      %s176 = sphi 0, %s175
      %s192 = sphi 0, %s176
    $region4: #{tpu_custom_call.1} parent=1 // loop_header_branch
      %20 = sbr.rel (%p18) target = $region8
    $region5: #{tpu_custom_call.1} parent=1 // loop_body
      %s22 = ssub.s32 %s17, 1
      %s23 = ssub.s32 %s17, 2
      %s30 = sadd.s32 1, %s25
      %p31 = scmp.ge.s32.totalorder %s30, 2
      %s32 = scalar_select %p31, 0, %s30
      %s33 = sadd.s32 1, %s24
      %s34 = scalar_select %p31, %s33, %s24
      %p35 = scmp.ge.s32.totalorder %s34, 1
      %s36 = scalar_select %p35, 0, %s34
      %s37 = ssub.s32 %s24, %s36
      %p38 = scmp.eq.s32.totalorder %s37, 0
      %s40 = sadd.s32 %s39, 1
      %s41 = scalar_select %p38, %s39, %s40
      %p44 = pneg %p38
      %p45 = scmp.eq.s32.totalorder %s17, 1
      %p46 = por %p44, %p45
      %p47 = scmp.ne.s32.totalorder %s39, %s42
      %p48 = scmp.eq.s32.totalorder %s17, 0
      %p49 = por %p47, %p48
      %p50 = scmp.ne.s32.totalorder %s39, %s42
      %p51 = scmp.eq.s32.totalorder %s22, 1
      %p52 = por %p50, %p51
      %p53 = scmp.ne.s32.totalorder %s42, %s43
      %p54 = scmp.eq.s32.totalorder %s22, 0
      %p55 = por %p53, %p54
      %p56 = scmp.ne.s32.totalorder %s42, %s43
      %p57 = scmp.eq.s32.totalorder %s23, 1
      %p58 = por %p56, %p57
      %p60 = scmp.ne.s32.totalorder %s43, %s59
      %p61 = scmp.eq.s32.totalorder %s23, 0
      %p62 = por %p60, %p61
      %s64 = sadd.s32 %s63, 1
      %p67 = scmp.eq.s32.totalorder %s17, 1
      %p68 = scmp.ne.s32.totalorder %s63, %s65
      %p69 = scmp.eq.s32.totalorder %s17, 0
      %p70 = por %p68, %p69
      %p71 = scmp.ne.s32.totalorder %s63, %s65
      %p72 = scmp.eq.s32.totalorder %s22, 1
      %p73 = por %p71, %p72
      %p74 = scmp.ne.s32.totalorder %s65, %s66
      %p75 = scmp.eq.s32.totalorder %s22, 0
      %p76 = por %p74, %p75
      %p77 = scmp.ne.s32.totalorder %s65, %s66
      %p78 = scmp.eq.s32.totalorder %s23, 1
      %p79 = por %p77, %p78
      %p81 = scmp.ne.s32.totalorder %s66, %s80
      %p82 = scmp.eq.s32.totalorder %s23, 0
      %p83 = por %p81, %p82
      %s85 = sadd.s32 %s84, 1
      %p88 = scmp.eq.s32.totalorder %s17, 1
      %p89 = scmp.ne.s32.totalorder %s84, %s86
      %p90 = scmp.eq.s32.totalorder %s17, 0
      %p91 = por %p89, %p90
      %p92 = scmp.ne.s32.totalorder %s84, %s86
      %p93 = scmp.eq.s32.totalorder %s22, 1
      %p94 = por %p92, %p93
      %p95 = scmp.ne.s32.totalorder %s86, %s87
      %p96 = scmp.eq.s32.totalorder %s22, 0
      %p97 = por %p95, %p96
      %p98 = scmp.ne.s32.totalorder %s86, %s87
      %p99 = scmp.eq.s32.totalorder %s23, 1
      %p100 = por %p98, %p99
      %p102 = scmp.ne.s32.totalorder %s87, %s101
      %p103 = scmp.eq.s32.totalorder %s23, 0
      %p104 = por %p102, %p103
      %s106 = sadd.s32 %s105, 1
      %p109 = scmp.eq.s32.totalorder %s17, 1
      %p110 = scmp.ne.s32.totalorder %s105, %s107
      %p111 = scmp.eq.s32.totalorder %s17, 0
      %p112 = por %p110, %p111
      %p113 = scmp.ne.s32.totalorder %s105, %s107
      %p114 = scmp.eq.s32.totalorder %s22, 1
      %p115 = por %p113, %p114
      %p116 = scmp.ne.s32.totalorder %s107, %s108
      %p117 = scmp.eq.s32.totalorder %s22, 0
      %p118 = por %p116, %p117
      %p119 = scmp.ne.s32.totalorder %s107, %s108
      %p120 = scmp.eq.s32.totalorder %s23, 1
      %p121 = por %p119, %p120
      %p123 = scmp.ne.s32.totalorder %s108, %s122
      %p124 = scmp.eq.s32.totalorder %s23, 0
      %p125 = por %p123, %p124
      %s127 = sadd.s32 %s126, 1
      %p130 = scmp.eq.s32.totalorder %s17, 1
      %p131 = scmp.ne.s32.totalorder %s126, %s128
      %p132 = scmp.eq.s32.totalorder %s17, 0
      %p133 = por %p131, %p132
      %p134 = scmp.ne.s32.totalorder %s126, %s128
      %p135 = scmp.eq.s32.totalorder %s22, 1
      %p136 = por %p134, %p135
      %p137 = scmp.ne.s32.totalorder %s128, %s129
      %p138 = scmp.eq.s32.totalorder %s22, 0
      %p139 = por %p137, %p138
      %p140 = scmp.ne.s32.totalorder %s128, %s129
      %p141 = scmp.eq.s32.totalorder %s23, 1
      %p142 = por %p140, %p141
      %p144 = scmp.ne.s32.totalorder %s129, %s143
      %p145 = scmp.eq.s32.totalorder %s23, 0
      %p146 = por %p144, %p145
      %s148 = sadd.s32 %s147, 1
      %p151 = scmp.eq.s32.totalorder %s17, 1
      %p152 = scmp.ne.s32.totalorder %s147, %s149
      %p153 = scmp.eq.s32.totalorder %s17, 0
      %p154 = por %p152, %p153
      %p155 = scmp.ne.s32.totalorder %s147, %s149
      %p156 = scmp.eq.s32.totalorder %s22, 1
      %p157 = por %p155, %p156
      %p158 = scmp.ne.s32.totalorder %s149, %s150
      %p159 = scmp.eq.s32.totalorder %s22, 0
      %p160 = por %p158, %p159
      %p161 = scmp.ne.s32.totalorder %s149, %s150
      %p162 = scmp.eq.s32.totalorder %s23, 1
      %p163 = por %p161, %p162
      %p165 = scmp.ne.s32.totalorder %s150, %s164
      %p166 = scmp.eq.s32.totalorder %s23, 0
      %p167 = por %p165, %p166
      %s168 = ssub.s32 %s25, %s32
      %s169 = ssub.s32 %s24, %s36
      %s170 = sor.u32 %s168, %s169
      %p171 = scmp.eq.s32.totalorder %s170, 0
      %s173 = sadd.s32 %s172, 1
      %s174 = scalar_select %p171, %s172, %s173
      %p177 = pneg %p171
      %p178 = scmp.eq.s32.totalorder %s17, 1
      %p179 = por %p177, %p178
      %p180 = scmp.ne.s32.totalorder %s172, %s175
      %p181 = scmp.eq.s32.totalorder %s17, 0
      %p182 = por %p180, %p181
      %p183 = scmp.ne.s32.totalorder %s172, %s175
      %p184 = scmp.eq.s32.totalorder %s22, 1
      %p185 = por %p183, %p184
      %p186 = scmp.ne.s32.totalorder %s175, %s176
      %p187 = scmp.eq.s32.totalorder %s22, 0
      %p188 = por %p186, %p187
      %p189 = scmp.ne.s32.totalorder %s175, %s176
      %p190 = scmp.eq.s32.totalorder %s23, 1
      %p191 = por %p189, %p190
      %p193 = scmp.ne.s32.totalorder %s176, %s192
      %p194 = scmp.eq.s32.totalorder %s23, 0
      %p195 = por %p193, %p194
      %p196 = scmp.le.s32.totalorder 1, %s17
      %p197 = scmp.lt.s32.totalorder %s17, 3
      %p198 = pnand %p196, %p197
      %p199 = pneg %p198
      // Predicated region
      $region9: #{tpu_custom_call.1} parent=5 // pred_check
        _
      $region10: #{tpu_custom_call.1} parent=5 // pred_check_branch
        %201 = sbr.rel (%p198) target = $region12
      $region11: #{tpu_custom_call.1} parent=5 // pred_region
        %s202 = ssub.s32 %s17, 1
        // Predicated region
        $region13: #{tpu_custom_call.1} parent=11 // pred_check
          %p203 = pneg %p55
        $region14: #{tpu_custom_call.1} parent=11 // pred_check_branch
          %205 = sbr.rel (%p203) target = $region16
        $region15: #{tpu_custom_call.1} parent=11 // pred_region
          %s207 = ssub.s32 512, 512
          %208 = vsyncadd [#allocation5], %s207
          %s209 = smul.addr %s26, 4
          %s210 = smul.addr %s209, 128
          %s211 = scalar_lea.hbm %s0, %s210
          %s213 = sshll.u32 [#allocation4], 4
          %s214 = int_to_ptr.vmem [resolvable:$true] %s213
          %216 = dma.hbm_to_vmem [thread:$0]  %s211, 512, %s214, [#allocation5]
        $region16: #{tpu_custom_call.1} parent=11 // pred_fallthru
          _
        // Predicated region
        $region17: #{tpu_custom_call.1} parent=11 // pred_check
          %p217 = pneg %p76
        $region18: #{tpu_custom_call.1} parent=11 // pred_check_branch
          %219 = sbr.rel (%p217) target = $region20
        $region19: #{tpu_custom_call.1} parent=11 // pred_region
          %s221 = ssub.s32 4096, 4096
          %222 = vsyncadd [#allocation8], %s221
          %s223 = sshll.u32 [#allocation7], 4
          %s224 = int_to_ptr.vmem [resolvable:$true] %s223
          %229 = dma.hbm_to_vmem [thread:$0]  %s1, 4096, %s224, [#allocation8], 256, 256, 16
        $region20: #{tpu_custom_call.1} parent=11 // pred_fallthru
          _
        // Predicated region
        $region21: #{tpu_custom_call.1} parent=11 // pred_check
          %p230 = pneg %p97
        $region22: #{tpu_custom_call.1} parent=11 // pred_check_branch
          %232 = sbr.rel (%p230) target = $region24
        $region23: #{tpu_custom_call.1} parent=11 // pred_region
          _
        $region24: #{tpu_custom_call.1} parent=11 // pred_fallthru
          _
        // Predicated region
        $region25: #{tpu_custom_call.1} parent=11 // pred_check
          %p233 = pneg %p118
        $region26: #{tpu_custom_call.1} parent=11 // pred_check_branch
          %235 = sbr.rel (%p233) target = $region28
        $region27: #{tpu_custom_call.1} parent=11 // pred_region
          _
        $region28: #{tpu_custom_call.1} parent=11 // pred_fallthru
          _
        // Predicated region
        $region29: #{tpu_custom_call.1} parent=11 // pred_check
          %p236 = pneg %p139
        $region30: #{tpu_custom_call.1} parent=11 // pred_check_branch
          %238 = sbr.rel (%p236) target = $region32
        $region31: #{tpu_custom_call.1} parent=11 // pred_region
          _
        $region32: #{tpu_custom_call.1} parent=11 // pred_fallthru
          _
        // Predicated region
        $region33: #{tpu_custom_call.1} parent=11 // pred_check
          %p239 = pneg %p160
        $region34: #{tpu_custom_call.1} parent=11 // pred_check_branch
          %241 = sbr.rel (%p239) target = $region36
        $region35: #{tpu_custom_call.1} parent=11 // pred_region
          _
        $region36: #{tpu_custom_call.1} parent=11 // pred_fallthru
          _
      $region12: #{tpu_custom_call.1} parent=5 // pred_fallthru
        _
      %p242 = scmp.lt.s32.totalorder %s17, 2
      // Predicated region
      $region37: #{tpu_custom_call.1} parent=5 // pred_check
        %p243 = pneg %p242
      $region38: #{tpu_custom_call.1} parent=5 // pred_check_branch
        %245 = sbr.rel (%p243) target = $region40
      $region39: #{tpu_custom_call.1} parent=5 // pred_region
        _
      $region40: #{tpu_custom_call.1} parent=5 // pred_fallthru
        _
      %p246 = scmp.le.s32.totalorder 1, %s17
      %p247 = scmp.lt.s32.totalorder %s17, 3
      %p248 = pnand %p246, %p247
      %p249 = pneg %p248
      // Predicated region
      $region41: #{tpu_custom_call.1} parent=5 // pred_check
        _
      $region42: #{tpu_custom_call.1} parent=5 // pred_check_branch
        %251 = sbr.rel (%p248) target = $region44
      $region43: #{tpu_custom_call.1} parent=5 // pred_region
        %s252 = ssub.s32 %s17, 1
        // Predicated region
        $region45: #{tpu_custom_call.1} parent=43 // pred_check
          %p253 = pneg %p55
        $region46: #{tpu_custom_call.1} parent=43 // pred_check_branch
          %255 = sbr.rel (%p253) target = $region48
        $region47: #{tpu_custom_call.1} parent=43 // pred_region
          %256 = dma.done [#allocation5], 512
        $region48: #{tpu_custom_call.1} parent=43 // pred_fallthru
          _
        // Predicated region
        $region49: #{tpu_custom_call.1} parent=43 // pred_check
          %p257 = pneg %p76
        $region50: #{tpu_custom_call.1} parent=43 // pred_check_branch
          %259 = sbr.rel (%p257) target = $region52
        $region51: #{tpu_custom_call.1} parent=43 // pred_region
          %260 = dma.done [#allocation8], 4096
        $region52: #{tpu_custom_call.1} parent=43 // pred_fallthru
          _
        %p261 = pneg %p55
        %p262 = pneg %p52
        %p263 = pneg %p76
        %p264 = pneg %p73
        %p265 = pneg %p97
        %p266 = pneg %p94
        %p267 = pneg %p118
        %p268 = pneg %p115
        %p269 = pneg %p139
        %p270 = pneg %p136
        %p271 = pneg %p160
        %p272 = pneg %p157
        %p273 = pneg %p188
        %p274 = pneg %p185
        %s275 = sand.u32 %s175, 1
        %s276 = scalar_lea.sflag [#allocation6], %s275
        %s277 = sand.u32 %s175, 1
        %s278 = smul.addr %s277, 64
        %s279 = scalar_lea.vmem [#allocation9], %s278
        %s280 = smul.u32 8, %s27
        %p282 = scmp.eq.s32.totalorder %s27, 0
        // Predicated region
        $region53: #{tpu_custom_call.1} parent=43 // pred_check
          %p283 = pneg %p282
        $region54: #{tpu_custom_call.1} parent=43 // pred_check_branch
          %285 = sbr.rel (%p283) target = $region56
        $region55: #{tpu_custom_call.1} parent=43 // pred_region
          %286 = vst [vmem:[#allocation2] sm:$0xff] 0.0
          %287 = vst [vmem:[#allocation3] sm:$0xff] 0.0
        $region56: #{tpu_custom_call.1} parent=43 // pred_fallthru
          _
        %v288 = vld [vmem:[#allocation4] sm:$0xff]
        %v289 = vld [vmem:[#allocation4 + $0x8] sm:$0xff]
        %v290 = vld [vmem:[#allocation4 + $0x10] sm:$0xff]
        %v291 = vld [vmem:[#allocation4 + $0x18] sm:$0xff]
        %v292 = vld [vmem:[#allocation7] sm:$0xff]
        %v293 = vld [vmem:[#allocation7 + $0x8] sm:$0xff]
        %v294 = vld [vmem:[#allocation7 + $0x10] sm:$0xff]
        %v295 = vld [vmem:[#allocation7 + $0x18] sm:$0xff]
        %v296 = vld [vmem:[#allocation7 + $0x20] sm:$0xff]
        %v297 = vld [vmem:[#allocation7 + $0x28] sm:$0xff]
        %v298 = vld [vmem:[#allocation7 + $0x30] sm:$0xff]
        %v299 = vld [vmem:[#allocation7 + $0x38] sm:$0xff]
        %v300 = vld [vmem:[#allocation7 + $0x40] sm:$0xff]
        %v301 = vld [vmem:[#allocation7 + $0x48] sm:$0xff]
        %v302 = vld [vmem:[#allocation7 + $0x50] sm:$0xff]
        %v303 = vld [vmem:[#allocation7 + $0x58] sm:$0xff]
        %v304 = vld [vmem:[#allocation7 + $0x60] sm:$0xff]
        %v305 = vld [vmem:[#allocation7 + $0x68] sm:$0xff]
        %v306 = vld [vmem:[#allocation7 + $0x70] sm:$0xff]
        %v307 = vld [vmem:[#allocation7 + $0x78] sm:$0xff]
        %v308 = vld [vmem:[#allocation7 + $0x80] sm:$0xff]
        %v309 = vld [vmem:[#allocation7 + $0x88] sm:$0xff]
        %v310 = vld [vmem:[#allocation7 + $0x90] sm:$0xff]
        %v311 = vld [vmem:[#allocation7 + $0x98] sm:$0xff]
        %v312 = vld [vmem:[#allocation7 + $0xa0] sm:$0xff]
        %v313 = vld [vmem:[#allocation7 + $0xa8] sm:$0xff]
        %v314 = vld [vmem:[#allocation7 + $0xb0] sm:$0xff]
        %v315 = vld [vmem:[#allocation7 + $0xb8] sm:$0xff]
        %v316 = vld [vmem:[#allocation7 + $0xc0] sm:$0xff]
        %v317 = vld [vmem:[#allocation7 + $0xc8] sm:$0xff]
        %v318 = vld [vmem:[#allocation7 + $0xd0] sm:$0xff]
        %v319 = vld [vmem:[#allocation7 + $0xd8] sm:$0xff]
        %v320 = vld [vmem:[#allocation7 + $0xe0] sm:$0xff]
        %v321 = vld [vmem:[#allocation7 + $0xe8] sm:$0xff]
        %v322 = vld [vmem:[#allocation7 + $0xf0] sm:$0xff]
        %v323 = vld [vmem:[#allocation7 + $0xf8] sm:$0xff]
        %v324 = vld [vmem:[%s2] sm:$0x1]
        %v325 = vld [vmem:[%s3] sm:$0x1]
        %v326 = vld [vmem:[%s4] sm:$0x1]
        %v327 = vld [vmem:[%s5] sm:$0x1]
        %v328 = vld [vmem:[#allocation2] sm:$0xff]
        %v329 = vld [vmem:[#allocation3] sm:$0xff]
        %330 = vadd.xlane.f32.xlu0 %v328
        %v331 = vpop.xlane.xlu0 %330
        %v332 = vrcp.pop 128.0
        %v333 = vmul.f32 %v331, %v332
        %v334 = vmul.f32 %v328, %v328
        %335 = vadd.xlane.f32.xlu0 %v334
        %v336 = vpop.xlane.xlu0 %335
        %v337 = vmul.f32 %v336, %v332
        %v338 = vmul.f32 %v333, %v333
        %v339 = vsub.f32 %v337, %v338
        %v340 = vsub.f32 %v328, %v333
        %v341 = vadd.f32 %v339, 1e-05
        %v342 = vrsqrt.pop %v341
        %v343 = vmul.f32 %v340, %v342
        %v345 = vlaneseq
        %v346 = vshrl.u32 %v345, 7
        %v347 = vsub.s32 0, %v346
        %v348 = vrot.slane %v324, %v347
        %v350 = vmul.f32 %v343, %v348
        %v352 = vlaneseq
        %v353 = vshrl.u32 %v352, 7
        %v354 = vsub.s32 0, %v353
        %v355 = vrot.slane %v325, %v354
        %v357 = vadd.f32 %v350, %v355
        %358 = vadd.xlane.f32.xlu0 %v329
        %v359 = vpop.xlane.xlu0 %358
        %v360 = vmul.f32 %v359, %v332
        %v361 = vmul.f32 %v329, %v329
        %362 = vadd.xlane.f32.xlu0 %v361
        %v363 = vpop.xlane.xlu0 %362
        %v364 = vmul.f32 %v363, %v332
        %v365 = vmul.f32 %v360, %v360
        %v366 = vsub.f32 %v364, %v365
        %v367 = vsub.f32 %v329, %v360
        %v368 = vadd.f32 %v366, 1e-05
        %v369 = vrsqrt.pop %v368
        %v370 = vmul.f32 %v367, %v369
        %v372 = vlaneseq
        %v373 = vshrl.u32 %v372, 7
        %v374 = vsub.s32 0, %v373
        %v375 = vrot.slane %v326, %v374
        %v377 = vmul.f32 %v370, %v375
        %v379 = vlaneseq
        %v380 = vshrl.u32 %v379, 7
        %v381 = vsub.s32 0, %v380
        %v382 = vrot.slane %v327, %v381
        %v384 = vadd.f32 %v377, %v382
        %v385 = vpack.c.bf16 %v357, %v357
        %v418 = vunpack.c.l.b16 %v292
        %v419 = vunpack.c.h.b16 %v292
        %v420 = vunpack.c.l.b16 %v293
        %v421 = vunpack.c.h.b16 %v293
        %v422 = vunpack.c.l.b16 %v294
        %v423 = vunpack.c.h.b16 %v294
        %v424 = vunpack.c.l.b16 %v295
        %v425 = vunpack.c.h.b16 %v295
        %v426 = vunpack.c.l.b16 %v296
        %v427 = vunpack.c.h.b16 %v296
        %v428 = vunpack.c.l.b16 %v297
        %v429 = vunpack.c.h.b16 %v297
        %v430 = vunpack.c.l.b16 %v298
        %v431 = vunpack.c.h.b16 %v298
        %v432 = vunpack.c.l.b16 %v299
        %v433 = vunpack.c.h.b16 %v299
        %v434 = vunpack.c.l.b16 %v300
        %v435 = vunpack.c.h.b16 %v300
        %v436 = vunpack.c.l.b16 %v301
        %v437 = vunpack.c.h.b16 %v301
        %v438 = vunpack.c.l.b16 %v302
        %v439 = vunpack.c.h.b16 %v302
        %v440 = vunpack.c.l.b16 %v303
        %v441 = vunpack.c.h.b16 %v303
        %v442 = vunpack.c.l.b16 %v304
        %v443 = vunpack.c.h.b16 %v304
        %v444 = vunpack.c.l.b16 %v305
        %v445 = vunpack.c.h.b16 %v305
        %v446 = vunpack.c.l.b16 %v306
        %v447 = vunpack.c.h.b16 %v306
        %v448 = vunpack.c.l.b16 %v307
        %v449 = vunpack.c.h.b16 %v307
        %v450 = vunpack.c.l.b16 %v308
        %v451 = vunpack.c.h.b16 %v308
        %v452 = vunpack.c.l.b16 %v309
        %v453 = vunpack.c.h.b16 %v309
        %v454 = vunpack.c.l.b16 %v310
        %v455 = vunpack.c.h.b16 %v310
        %v456 = vunpack.c.l.b16 %v311
        %v457 = vunpack.c.h.b16 %v311
        %v458 = vunpack.c.l.b16 %v312
        %v459 = vunpack.c.h.b16 %v312
        %v460 = vunpack.c.l.b16 %v313
        %v461 = vunpack.c.h.b16 %v313
        %v462 = vunpack.c.l.b16 %v314
        %v463 = vunpack.c.h.b16 %v314
        %v464 = vunpack.c.l.b16 %v315
        %v465 = vunpack.c.h.b16 %v315
        %v466 = vunpack.c.l.b16 %v316
        %v467 = vunpack.c.h.b16 %v316
        %v468 = vunpack.c.l.b16 %v317
        %v469 = vunpack.c.h.b16 %v317
        %v470 = vunpack.c.l.b16 %v318
        %v471 = vunpack.c.h.b16 %v318
        %v472 = vunpack.c.l.b16 %v319
        %v473 = vunpack.c.h.b16 %v319
        %v474 = vunpack.c.l.b16 %v320
        %v475 = vunpack.c.h.b16 %v320
        %v476 = vunpack.c.l.b16 %v321
        %v477 = vunpack.c.h.b16 %v321
        %v478 = vunpack.c.l.b16 %v322
        %v479 = vunpack.c.h.b16 %v322
        %v480 = vunpack.c.l.b16 %v323
        %v481 = vunpack.c.h.b16 %v323
        %v482 = vpack.c.b16 %v422, %v418
        %v483 = vpack.c.b16 %v423, %v419
        %v484 = vpack.c.b16 %v424, %v420
        %v485 = vpack.c.b16 %v425, %v421
        %v486 = vpack.c.b16 %v430, %v426
        %v487 = vpack.c.b16 %v431, %v427
        %v488 = vpack.c.b16 %v432, %v428
        %v489 = vpack.c.b16 %v433, %v429
        %v490 = vpack.c.b16 %v438, %v434
        %v491 = vpack.c.b16 %v439, %v435
        %v492 = vpack.c.b16 %v440, %v436
        %v493 = vpack.c.b16 %v441, %v437
        %v494 = vpack.c.b16 %v446, %v442
        %v495 = vpack.c.b16 %v447, %v443
        %v496 = vpack.c.b16 %v448, %v444
        %v497 = vpack.c.b16 %v449, %v445
        %v498 = vpack.c.b16 %v454, %v450
        %v499 = vpack.c.b16 %v455, %v451
        %v500 = vpack.c.b16 %v456, %v452
        %v501 = vpack.c.b16 %v457, %v453
        %v502 = vpack.c.b16 %v462, %v458
        %v503 = vpack.c.b16 %v463, %v459
        %v504 = vpack.c.b16 %v464, %v460
        %v505 = vpack.c.b16 %v465, %v461
        %v506 = vpack.c.b16 %v470, %v466
        %v507 = vpack.c.b16 %v471, %v467
        %v508 = vpack.c.b16 %v472, %v468
        %v509 = vpack.c.b16 %v473, %v469
        %v510 = vpack.c.b16 %v478, %v474
        %v511 = vpack.c.b16 %v479, %v475
        %v512 = vpack.c.b16 %v480, %v476
        %v513 = vpack.c.b16 %v481, %v477
        %546 = vmatprep.subr.bf16.mxu0 %v483
        %547 = vmatpush1.bf16.msra.mxu0 %v482
        %548 = vmatprep.subr.bf16.mxu0 %v487
        %549 = vmatpush1.bf16.msra.mxu0 %v486
        %550 = vmatprep.subr.bf16.mxu0 %v491
        %551 = vmatpush1.bf16.msra.mxu0 %v490
        %552 = vmatprep.subr.bf16.mxu0 %v495
        %553 = vmatpush1.bf16.msra.mxu0 %v494
        %554 = vmatprep.subr.bf16.mxu0 %v499
        %555 = vmatpush1.bf16.msra.mxu0 %v498
        %556 = vmatprep.subr.bf16.mxu0 %v503
        %557 = vmatpush1.bf16.msra.mxu0 %v502
        %558 = vmatprep.subr.bf16.mxu0 %v507
        %559 = vmatpush1.bf16.msra.mxu0 %v506
        %560 = vmatprep.subr.bf16.mxu0 %v511
        %561 = vmatpush1.bf16.msra.mxu0 %v510
        %562 = vmatprep.subr.bf16.mxu0 0
        %563 = vmatpush1.bf16.msra.mxu0 0
        %564 = vmatprep.subr.bf16.mxu0 0
        %565 = vmatpush1.bf16.msra.mxu0 0
        %566 = vmatprep.subr.bf16.mxu0 0
        %567 = vmatpush1.bf16.msra.mxu0 0
        %568 = vmatprep.subr.bf16.mxu0 0
        %569 = vmatpush1.bf16.msra.mxu0 0
        %570 = vmatprep.subr.bf16.mxu0 0
        %571 = vmatpush1.bf16.msra.mxu0 0
        %572 = vmatprep.subr.bf16.mxu0 0
        %573 = vmatpush1.bf16.msra.mxu0 0
        %574 = vmatprep.subr.bf16.mxu0 0
        %575 = vmatpush1.bf16.msra.mxu0 0
        %576 = vmatprep.subr.bf16.mxu0 0
        %577 = vmatpush1.bf16.msra.mxu0 0
        %578 = vmatprep.mubr.bf16.mxu0 0
        %579 = vmatmul.mubr.bf16.gmra.mrb[0].mxu0 %v385
        %v580 = vpop.f32.mrb[0].mxu0
        %v581 = vadd.f32 0.0, %v580
        %v582 = vpop.f32.mrb[0].mxu0
        %v583 = vadd.f32 0.0, %v582
        %v584 = vpop.f32.mrb[0].mxu0
        %v585 = vpop.f32.mrb[0].mxu0
        %586 = vdwg.mxu0
        %587 = vmatprep.subr.bf16.mxu0 %v485
        %588 = vmatpush1.bf16.msra.mxu0 %v484
        %589 = vmatprep.subr.bf16.mxu0 %v489
        %590 = vmatpush1.bf16.msra.mxu0 %v488
        %591 = vmatprep.subr.bf16.mxu0 %v493
        %592 = vmatpush1.bf16.msra.mxu0 %v492
        %593 = vmatprep.subr.bf16.mxu0 %v497
        %594 = vmatpush1.bf16.msra.mxu0 %v496
        %595 = vmatprep.subr.bf16.mxu0 %v501
        %596 = vmatpush1.bf16.msra.mxu0 %v500
        %597 = vmatprep.subr.bf16.mxu0 %v505
        %598 = vmatpush1.bf16.msra.mxu0 %v504
        %599 = vmatprep.subr.bf16.mxu0 %v509
        %600 = vmatpush1.bf16.msra.mxu0 %v508
        %601 = vmatprep.subr.bf16.mxu0 %v513
        %602 = vmatpush1.bf16.msra.mxu0 %v512
        %603 = vmatprep.subr.bf16.mxu0 0
        %604 = vmatpush1.bf16.msra.mxu0 0
        %605 = vmatprep.subr.bf16.mxu0 0
        %606 = vmatpush1.bf16.msra.mxu0 0
        %607 = vmatprep.subr.bf16.mxu0 0
        %608 = vmatpush1.bf16.msra.mxu0 0
        %609 = vmatprep.subr.bf16.mxu0 0
        %610 = vmatpush1.bf16.msra.mxu0 0
        %611 = vmatprep.subr.bf16.mxu0 0
        %612 = vmatpush1.bf16.msra.mxu0 0
        %613 = vmatprep.subr.bf16.mxu0 0
        %614 = vmatpush1.bf16.msra.mxu0 0
        %615 = vmatprep.subr.bf16.mxu0 0
        %616 = vmatpush1.bf16.msra.mxu0 0
        %617 = vmatprep.subr.bf16.mxu0 0
        %618 = vmatpush1.bf16.msra.mxu0 0
        %619 = vmatprep.mubr.bf16.mxu0 0
        %620 = vmatmul.mubr.bf16.gmra.mrb[0].mxu0 %v385
        %v621 = vpop.f32.mrb[0].mxu0
        %v622 = vadd.f32 0.0, %v621
        %v623 = vpop.f32.mrb[0].mxu0
        %v624 = vadd.f32 0.0, %v623
        %v625 = vpop.f32.mrb[0].mxu0
        %v626 = vpop.f32.mrb[0].mxu0
        %627 = vdwg.mxu0
        %v628 = vadd.f32 %v288, %v581
        %v629 = vadd.f32 %v289, %v583
        %v630 = vadd.f32 %v290, %v622
        %v631 = vadd.f32 %v291, %v624
        %v632 = vxor.u32 %v628, 2147483648
        %v633 = vmul.f32 %v632, 1.442695
        %v634 = vpow.pop %v633
        %v635 = vadd.f32 %v634, 1.0
        %v636 = vrcp.pop %v635
        %v637 = vmul.f32 1.0, %v636
        %v638 = vxor.u32 %v629, 2147483648
        %v639 = vmul.f32 %v638, 1.442695
        %v640 = vpow.pop %v639
        %v641 = vadd.f32 %v640, 1.0
        %v642 = vrcp.pop %v641
        %v643 = vmul.f32 1.0, %v642
        %v644 = vtanh.pop %v630
        %v645 = vxor.u32 %v631, 2147483648
        %v646 = vmul.f32 %v645, 1.442695
        %v647 = vpow.pop %v646
        %v648 = vadd.f32 %v647, 1.0
        %v649 = vrcp.pop %v648
        %v650 = vmul.f32 1.0, %v649
        %v651 = vmul.f32 %v643, %v384
        %v652 = vmul.f32 %v637, %v644
        %v653 = vadd.f32 %v651, %v652
        %v654 = vtanh.pop %v653
        %v655 = vmul.f32 %v650, %v654
        %656 = vst [vmem:[%s279] sm:$0xff] %v655
        %657 = vadd.xlane.f32.xlu0 %v655
        %v658 = vpop.xlane.xlu0 %657
        %v659 = vmul.f32 %v658, %v332
        %v660 = vmul.f32 %v655, %v655
        %661 = vadd.xlane.f32.xlu0 %v660
        %v662 = vpop.xlane.xlu0 %661
        %v663 = vmul.f32 %v662, %v332
        %v664 = vmul.f32 %v659, %v659
        %v665 = vsub.f32 %v663, %v664
        %v666 = vsub.f32 %v655, %v659
        %v667 = vadd.f32 %v665, 1e-05
        %v668 = vrsqrt.pop %v667
        %v669 = vmul.f32 %v666, %v668
        %v670 = vmul.f32 %v669, %v348
        %v671 = vadd.f32 %v670, %v355
        %672 = vadd.xlane.f32.xlu0 %v653
        %v673 = vpop.xlane.xlu0 %672
        %v674 = vmul.f32 %v673, %v332
        %v675 = vmul.f32 %v653, %v653
        %676 = vadd.xlane.f32.xlu0 %v675
        %v677 = vpop.xlane.xlu0 %676
        %v678 = vmul.f32 %v677, %v332
        %v679 = vmul.f32 %v674, %v674
        %v680 = vsub.f32 %v678, %v679
        %v681 = vsub.f32 %v653, %v674
        %v682 = vadd.f32 %v680, 1e-05
        %v683 = vrsqrt.pop %v682
        %v684 = vmul.f32 %v681, %v683
        %v685 = vmul.f32 %v684, %v375
        %v686 = vadd.f32 %v685, %v382
        %v687 = vpack.c.bf16 %v671, %v671
        %688 = vmatprep.subr.bf16.mxu0 %v483
        %689 = vmatpush1.bf16.msra.mxu0 %v482
        %690 = vmatprep.subr.bf16.mxu0 %v487
        %691 = vmatpush1.bf16.msra.mxu0 %v486
        %692 = vmatprep.subr.bf16.mxu0 %v491
        %693 = vmatpush1.bf16.msra.mxu0 %v490
        %694 = vmatprep.subr.bf16.mxu0 %v495
        %695 = vmatpush1.bf16.msra.mxu0 %v494
        %696 = vmatprep.subr.bf16.mxu0 %v499
        %697 = vmatpush1.bf16.msra.mxu0 %v498
        %698 = vmatprep.subr.bf16.mxu0 %v503
        %699 = vmatpush1.bf16.msra.mxu0 %v502
        %700 = vmatprep.subr.bf16.mxu0 %v507
        %701 = vmatpush1.bf16.msra.mxu0 %v506
        %702 = vmatprep.subr.bf16.mxu0 %v511
        %703 = vmatpush1.bf16.msra.mxu0 %v510
        %704 = vmatprep.subr.bf16.mxu0 0
        %705 = vmatpush1.bf16.msra.mxu0 0
        %706 = vmatprep.subr.bf16.mxu0 0
        %707 = vmatpush1.bf16.msra.mxu0 0
        %708 = vmatprep.subr.bf16.mxu0 0
        %709 = vmatpush1.bf16.msra.mxu0 0
        %710 = vmatprep.subr.bf16.mxu0 0
        %711 = vmatpush1.bf16.msra.mxu0 0
        %712 = vmatprep.subr.bf16.mxu0 0
        %713 = vmatpush1.bf16.msra.mxu0 0
        %714 = vmatprep.subr.bf16.mxu0 0
        %715 = vmatpush1.bf16.msra.mxu0 0
        %716 = vmatprep.subr.bf16.mxu0 0
        %717 = vmatpush1.bf16.msra.mxu0 0
        %718 = vmatprep.subr.bf16.mxu0 0
        %719 = vmatpush1.bf16.msra.mxu0 0
        %720 = vmatprep.mubr.bf16.mxu0 0
        %721 = vmatmul.mubr.bf16.gmra.mrb[0].mxu0 %v687
        %v722 = vpop.f32.mrb[0].mxu0
        %v723 = vadd.f32 0.0, %v722
        %v724 = vpop.f32.mrb[0].mxu0
        %v725 = vadd.f32 0.0, %v724
        %v726 = vpop.f32.mrb[0].mxu0
        %v727 = vpop.f32.mrb[0].mxu0
        %728 = vdwg.mxu0
        %729 = vmatprep.subr.bf16.mxu0 %v485
        %730 = vmatpush1.bf16.msra.mxu0 %v484
        %731 = vmatprep.subr.bf16.mxu0 %v489
        %732 = vmatpush1.bf16.msra.mxu0 %v488
        %733 = vmatprep.subr.bf16.mxu0 %v493
        %734 = vmatpush1.bf16.msra.mxu0 %v492
        %735 = vmatprep.subr.bf16.mxu0 %v497
        %736 = vmatpush1.bf16.msra.mxu0 %v496
        %737 = vmatprep.subr.bf16.mxu0 %v501
        %738 = vmatpush1.bf16.msra.mxu0 %v500
        %739 = vmatprep.subr.bf16.mxu0 %v505
        %740 = vmatpush1.bf16.msra.mxu0 %v504
        %741 = vmatprep.subr.bf16.mxu0 %v509
        %742 = vmatpush1.bf16.msra.mxu0 %v508
        %743 = vmatprep.subr.bf16.mxu0 %v513
        %744 = vmatpush1.bf16.msra.mxu0 %v512
        %745 = vmatprep.subr.bf16.mxu0 0
        %746 = vmatpush1.bf16.msra.mxu0 0
        %747 = vmatprep.subr.bf16.mxu0 0
        %748 = vmatpush1.bf16.msra.mxu0 0
        %749 = vmatprep.subr.bf16.mxu0 0
        %750 = vmatpush1.bf16.msra.mxu0 0
        %751 = vmatprep.subr.bf16.mxu0 0
        %752 = vmatpush1.bf16.msra.mxu0 0
        %753 = vmatprep.subr.bf16.mxu0 0
        %754 = vmatpush1.bf16.msra.mxu0 0
        %755 = vmatprep.subr.bf16.mxu0 0
        %756 = vmatpush1.bf16.msra.mxu0 0
        %757 = vmatprep.subr.bf16.mxu0 0
        %758 = vmatpush1.bf16.msra.mxu0 0
        %759 = vmatprep.subr.bf16.mxu0 0
        %760 = vmatpush1.bf16.msra.mxu0 0
        %761 = vmatprep.mubr.bf16.mxu0 0
        %762 = vmatmul.mubr.bf16.gmra.mrb[0].mxu0 %v687
        %v763 = vpop.f32.mrb[0].mxu0
        %v764 = vadd.f32 0.0, %v763
        %v765 = vpop.f32.mrb[0].mxu0
        %v766 = vadd.f32 0.0, %v765
        %v767 = vpop.f32.mrb[0].mxu0
        %v768 = vpop.f32.mrb[0].mxu0
        %769 = vdwg.mxu0
        %v770 = vadd.f32 %v288, %v723
        %v771 = vadd.f32 %v289, %v725
        %v772 = vadd.f32 %v290, %v764
        %v773 = vadd.f32 %v291, %v766
        %v774 = vxor.u32 %v770, 2147483648
        %v775 = vmul.f32 %v774, 1.442695
        %v776 = vpow.pop %v775
        %v777 = vadd.f32 %v776, 1.0
        %v778 = vrcp.pop %v777
        %v779 = vmul.f32 1.0, %v778
        %v780 = vxor.u32 %v771, 2147483648
        %v781 = vmul.f32 %v780, 1.442695
        %v782 = vpow.pop %v781
        %v783 = vadd.f32 %v782, 1.0
        %v784 = vrcp.pop %v783
        %v785 = vmul.f32 1.0, %v784
        %v786 = vtanh.pop %v772
        %v787 = vxor.u32 %v773, 2147483648
        %v788 = vmul.f32 %v787, 1.442695
        %v789 = vpow.pop %v788
        %v790 = vadd.f32 %v789, 1.0
        %v791 = vrcp.pop %v790
        %v792 = vmul.f32 1.0, %v791
        %v793 = vmul.f32 %v785, %v686
        %v794 = vmul.f32 %v779, %v786
        %v795 = vadd.f32 %v793, %v794
        %v796 = vtanh.pop %v795
        %v797 = vmul.f32 %v792, %v796
        %s798 = scalar_lea.vmem %s279, 8 [#allocation9]
        %799 = vst [vmem:[%s798] sm:$0xff] %v797
        %800 = vadd.xlane.f32.xlu0 %v797
        %v801 = vpop.xlane.xlu0 %800
        %v802 = vmul.f32 %v801, %v332
        %v803 = vmul.f32 %v797, %v797
        %804 = vadd.xlane.f32.xlu0 %v803
        %v805 = vpop.xlane.xlu0 %804
        %v806 = vmul.f32 %v805, %v332
        %v807 = vmul.f32 %v802, %v802
        %v808 = vsub.f32 %v806, %v807
        %v809 = vsub.f32 %v797, %v802
        %v810 = vadd.f32 %v808, 1e-05
        %v811 = vrsqrt.pop %v810
        %v812 = vmul.f32 %v809, %v811
        %v813 = vmul.f32 %v812, %v348
        %v814 = vadd.f32 %v813, %v355
        %815 = vadd.xlane.f32.xlu0 %v795
        %v816 = vpop.xlane.xlu0 %815
        %v817 = vmul.f32 %v816, %v332
        %v818 = vmul.f32 %v795, %v795
        %819 = vadd.xlane.f32.xlu0 %v818
        %v820 = vpop.xlane.xlu0 %819
        %v821 = vmul.f32 %v820, %v332
        %v822 = vmul.f32 %v817, %v817
        %v823 = vsub.f32 %v821, %v822
        %v824 = vsub.f32 %v795, %v817
        %v825 = vadd.f32 %v823, 1e-05
        %v826 = vrsqrt.pop %v825
        %v827 = vmul.f32 %v824, %v826
        %v828 = vmul.f32 %v827, %v375
        %v829 = vadd.f32 %v828, %v382
        %v830 = vpack.c.bf16 %v814, %v814
        %831 = vmatprep.subr.bf16.mxu0 %v483
        %832 = vmatpush1.bf16.msra.mxu0 %v482
        %833 = vmatprep.subr.bf16.mxu0 %v487
        %834 = vmatpush1.bf16.msra.mxu0 %v486
        %835 = vmatprep.subr.bf16.mxu0 %v491
        %836 = vmatpush1.bf16.msra.mxu0 %v490
        %837 = vmatprep.subr.bf16.mxu0 %v495
        %838 = vmatpush1.bf16.msra.mxu0 %v494
        %839 = vmatprep.subr.bf16.mxu0 %v499
        %840 = vmatpush1.bf16.msra.mxu0 %v498
        %841 = vmatprep.subr.bf16.mxu0 %v503
        %842 = vmatpush1.bf16.msra.mxu0 %v502
        %843 = vmatprep.subr.bf16.mxu0 %v507
        %844 = vmatpush1.bf16.msra.mxu0 %v506
        %845 = vmatprep.subr.bf16.mxu0 %v511
        %846 = vmatpush1.bf16.msra.mxu0 %v510
        %847 = vmatprep.subr.bf16.mxu0 0
        %848 = vmatpush1.bf16.msra.mxu0 0
        %849 = vmatprep.subr.bf16.mxu0 0
        %850 = vmatpush1.bf16.msra.mxu0 0
        %851 = vmatprep.subr.bf16.mxu0 0
        %852 = vmatpush1.bf16.msra.mxu0 0
        %853 = vmatprep.subr.bf16.mxu0 0
        %854 = vmatpush1.bf16.msra.mxu0 0
        %855 = vmatprep.subr.bf16.mxu0 0
        %856 = vmatpush1.bf16.msra.mxu0 0
        %857 = vmatprep.subr.bf16.mxu0 0
        %858 = vmatpush1.bf16.msra.mxu0 0
        %859 = vmatprep.subr.bf16.mxu0 0
        %860 = vmatpush1.bf16.msra.mxu0 0
        %861 = vmatprep.subr.bf16.mxu0 0
        %862 = vmatpush1.bf16.msra.mxu0 0
        %863 = vmatprep.mubr.bf16.mxu0 0
        %864 = vmatmul.mubr.bf16.gmra.mrb[0].mxu0 %v830
        %v865 = vpop.f32.mrb[0].mxu0
        %v866 = vadd.f32 0.0, %v865
        %v867 = vpop.f32.mrb[0].mxu0
        %v868 = vadd.f32 0.0, %v867
        %v869 = vpop.f32.mrb[0].mxu0
        %v870 = vpop.f32.mrb[0].mxu0
        %871 = vdwg.mxu0
        %872 = vmatprep.subr.bf16.mxu0 %v485
        %873 = vmatpush1.bf16.msra.mxu0 %v484
        %874 = vmatprep.subr.bf16.mxu0 %v489
        %875 = vmatpush1.bf16.msra.mxu0 %v488
        %876 = vmatprep.subr.bf16.mxu0 %v493
        %877 = vmatpush1.bf16.msra.mxu0 %v492
        %878 = vmatprep.subr.bf16.mxu0 %v497
        %879 = vmatpush1.bf16.msra.mxu0 %v496
        %880 = vmatprep.subr.bf16.mxu0 %v501
        %881 = vmatpush1.bf16.msra.mxu0 %v500
        %882 = vmatprep.subr.bf16.mxu0 %v505
        %883 = vmatpush1.bf16.msra.mxu0 %v504
        %884 = vmatprep.subr.bf16.mxu0 %v509
        %885 = vmatpush1.bf16.msra.mxu0 %v508
        %886 = vmatprep.subr.bf16.mxu0 %v513
        %887 = vmatpush1.bf16.msra.mxu0 %v512
        %888 = vmatprep.subr.bf16.mxu0 0
        %889 = vmatpush1.bf16.msra.mxu0 0
        %890 = vmatprep.subr.bf16.mxu0 0
        %891 = vmatpush1.bf16.msra.mxu0 0
        %892 = vmatprep.subr.bf16.mxu0 0
        %893 = vmatpush1.bf16.msra.mxu0 0
        %894 = vmatprep.subr.bf16.mxu0 0
        %895 = vmatpush1.bf16.msra.mxu0 0
        %896 = vmatprep.subr.bf16.mxu0 0
        %897 = vmatpush1.bf16.msra.mxu0 0
        %898 = vmatprep.subr.bf16.mxu0 0
        %899 = vmatpush1.bf16.msra.mxu0 0
        %900 = vmatprep.subr.bf16.mxu0 0
        %901 = vmatpush1.bf16.msra.mxu0 0
        %902 = vmatprep.subr.bf16.mxu0 0
        %903 = vmatpush1.bf16.msra.mxu0 0
        %904 = vmatprep.mubr.bf16.mxu0 0
        %905 = vmatmul.mubr.bf16.gmra.mrb[0].mxu0 %v830
        %v906 = vpop.f32.mrb[0].mxu0
        %v907 = vadd.f32 0.0, %v906
        %v908 = vpop.f32.mrb[0].mxu0
        %v909 = vadd.f32 0.0, %v908
        %v910 = vpop.f32.mrb[0].mxu0
        %v911 = vpop.f32.mrb[0].mxu0
        %912 = vdwg.mxu0
        %v913 = vadd.f32 %v288, %v866
        %v914 = vadd.f32 %v289, %v868
        %v915 = vadd.f32 %v290, %v907
        %v916 = vadd.f32 %v291, %v909
        %v917 = vxor.u32 %v913, 2147483648
        %v918 = vmul.f32 %v917, 1.442695
        %v919 = vpow.pop %v918
        %v920 = vadd.f32 %v919, 1.0
        %v921 = vrcp.pop %v920
        %v922 = vmul.f32 1.0, %v921
        %v923 = vxor.u32 %v914, 2147483648
        %v924 = vmul.f32 %v923, 1.442695
        %v925 = vpow.pop %v924
        %v926 = vadd.f32 %v925, 1.0
        %v927 = vrcp.pop %v926
        %v928 = vmul.f32 1.0, %v927
        %v929 = vtanh.pop %v915
        %v930 = vxor.u32 %v916, 2147483648
        %v931 = vmul.f32 %v930, 1.442695
        %v932 = vpow.pop %v931
        %v933 = vadd.f32 %v932, 1.0
        %v934 = vrcp.pop %v933
        %v935 = vmul.f32 1.0, %v934
        %v936 = vmul.f32 %v928, %v829
        %v937 = vmul.f32 %v922, %v929
        %v938 = vadd.f32 %v936, %v937
        %v939 = vtanh.pop %v938
        %v940 = vmul.f32 %v935, %v939
        %s941 = scalar_lea.vmem %s279, 16 [#allocation9]
        %942 = vst [vmem:[%s941] sm:$0xff] %v940
        %943 = vadd.xlane.f32.xlu0 %v940
        %v944 = vpop.xlane.xlu0 %943
        %v945 = vmul.f32 %v944, %v332
        %v946 = vmul.f32 %v940, %v940
        %947 = vadd.xlane.f32.xlu0 %v946
        %v948 = vpop.xlane.xlu0 %947
        %v949 = vmul.f32 %v948, %v332
        %v950 = vmul.f32 %v945, %v945
        %v951 = vsub.f32 %v949, %v950
        %v952 = vsub.f32 %v940, %v945
        %v953 = vadd.f32 %v951, 1e-05
        %v954 = vrsqrt.pop %v953
        %v955 = vmul.f32 %v952, %v954
        %v956 = vmul.f32 %v955, %v348
        %v957 = vadd.f32 %v956, %v355
        %958 = vadd.xlane.f32.xlu0 %v938
        %v959 = vpop.xlane.xlu0 %958
        %v960 = vmul.f32 %v959, %v332
        %v961 = vmul.f32 %v938, %v938
        %962 = vadd.xlane.f32.xlu0 %v961
        %v963 = vpop.xlane.xlu0 %962
        %v964 = vmul.f32 %v963, %v332
        %v965 = vmul.f32 %v960, %v960
        %v966 = vsub.f32 %v964, %v965
        %v967 = vsub.f32 %v938, %v960
        %v968 = vadd.f32 %v966, 1e-05
        %v969 = vrsqrt.pop %v968
        %v970 = vmul.f32 %v967, %v969
        %v971 = vmul.f32 %v970, %v375
        %v972 = vadd.f32 %v971, %v382
        %v973 = vpack.c.bf16 %v957, %v957
        %974 = vmatprep.subr.bf16.mxu0 %v483
        %975 = vmatpush1.bf16.msra.mxu0 %v482
        %976 = vmatprep.subr.bf16.mxu0 %v487
        %977 = vmatpush1.bf16.msra.mxu0 %v486
        %978 = vmatprep.subr.bf16.mxu0 %v491
        %979 = vmatpush1.bf16.msra.mxu0 %v490
        %980 = vmatprep.subr.bf16.mxu0 %v495
        %981 = vmatpush1.bf16.msra.mxu0 %v494
        %982 = vmatprep.subr.bf16.mxu0 %v499
        %983 = vmatpush1.bf16.msra.mxu0 %v498
        %984 = vmatprep.subr.bf16.mxu0 %v503
        %985 = vmatpush1.bf16.msra.mxu0 %v502
        %986 = vmatprep.subr.bf16.mxu0 %v507
        %987 = vmatpush1.bf16.msra.mxu0 %v506
        %988 = vmatprep.subr.bf16.mxu0 %v511
        %989 = vmatpush1.bf16.msra.mxu0 %v510
        %990 = vmatprep.subr.bf16.mxu0 0
        %991 = vmatpush1.bf16.msra.mxu0 0
        %992 = vmatprep.subr.bf16.mxu0 0
        %993 = vmatpush1.bf16.msra.mxu0 0
        %994 = vmatprep.subr.bf16.mxu0 0
        %995 = vmatpush1.bf16.msra.mxu0 0
        %996 = vmatprep.subr.bf16.mxu0 0
        %997 = vmatpush1.bf16.msra.mxu0 0
        %998 = vmatprep.subr.bf16.mxu0 0
        %999 = vmatpush1.bf16.msra.mxu0 0
        %1000 = vmatprep.subr.bf16.mxu0 0
        %1001 = vmatpush1.bf16.msra.mxu0 0
        %1002 = vmatprep.subr.bf16.mxu0 0
        %1003 = vmatpush1.bf16.msra.mxu0 0
        %1004 = vmatprep.subr.bf16.mxu0 0
        %1005 = vmatpush1.bf16.msra.mxu0 0
        %1006 = vmatprep.mubr.bf16.mxu0 0
        %1007 = vmatmul.mubr.bf16.gmra.mrb[0].mxu0 %v973
        %v1008 = vpop.f32.mrb[0].mxu0
        %v1009 = vadd.f32 0.0, %v1008
        %v1010 = vpop.f32.mrb[0].mxu0
        %v1011 = vadd.f32 0.0, %v1010
        %v1012 = vpop.f32.mrb[0].mxu0
        %v1013 = vpop.f32.mrb[0].mxu0
        %1014 = vdwg.mxu0
        %1015 = vmatprep.subr.bf16.mxu0 %v485
        %1016 = vmatpush1.bf16.msra.mxu0 %v484
        %1017 = vmatprep.subr.bf16.mxu0 %v489
        %1018 = vmatpush1.bf16.msra.mxu0 %v488
        %1019 = vmatprep.subr.bf16.mxu0 %v493
        %1020 = vmatpush1.bf16.msra.mxu0 %v492
        %1021 = vmatprep.subr.bf16.mxu0 %v497
        %1022 = vmatpush1.bf16.msra.mxu0 %v496
        %1023 = vmatprep.subr.bf16.mxu0 %v501
        %1024 = vmatpush1.bf16.msra.mxu0 %v500
        %1025 = vmatprep.subr.bf16.mxu0 %v505
        %1026 = vmatpush1.bf16.msra.mxu0 %v504
        %1027 = vmatprep.subr.bf16.mxu0 %v509
        %1028 = vmatpush1.bf16.msra.mxu0 %v508
        %1029 = vmatprep.subr.bf16.mxu0 %v513
        %1030 = vmatpush1.bf16.msra.mxu0 %v512
        %1031 = vmatprep.subr.bf16.mxu0 0
        %1032 = vmatpush1.bf16.msra.mxu0 0
        %1033 = vmatprep.subr.bf16.mxu0 0
        %1034 = vmatpush1.bf16.msra.mxu0 0
        %1035 = vmatprep.subr.bf16.mxu0 0
        %1036 = vmatpush1.bf16.msra.mxu0 0
        %1037 = vmatprep.subr.bf16.mxu0 0
        %1038 = vmatpush1.bf16.msra.mxu0 0
        %1039 = vmatprep.subr.bf16.mxu0 0
        %1040 = vmatpush1.bf16.msra.mxu0 0
        %1041 = vmatprep.subr.bf16.mxu0 0
        %1042 = vmatpush1.bf16.msra.mxu0 0
        %1043 = vmatprep.subr.bf16.mxu0 0
        %1044 = vmatpush1.bf16.msra.mxu0 0
        %1045 = vmatprep.subr.bf16.mxu0 0
        %1046 = vmatpush1.bf16.msra.mxu0 0
        %1047 = vmatprep.mubr.bf16.mxu0 0
        %1048 = vmatmul.mubr.bf16.gmra.mrb[0].mxu0 %v973
        %v1049 = vpop.f32.mrb[0].mxu0
        %v1050 = vadd.f32 0.0, %v1049
        %v1051 = vpop.f32.mrb[0].mxu0
        %v1052 = vadd.f32 0.0, %v1051
        %v1053 = vpop.f32.mrb[0].mxu0
        %v1054 = vpop.f32.mrb[0].mxu0
        %1055 = vdwg.mxu0
        %v1056 = vadd.f32 %v288, %v1009
        %v1057 = vadd.f32 %v289, %v1011
        %v1058 = vadd.f32 %v290, %v1050
        %v1059 = vadd.f32 %v291, %v1052
        %v1060 = vxor.u32 %v1056, 2147483648
        %v1061 = vmul.f32 %v1060, 1.442695
        %v1062 = vpow.pop %v1061
        %v1063 = vadd.f32 %v1062, 1.0
        %v1064 = vrcp.pop %v1063
        %v1065 = vmul.f32 1.0, %v1064
        %v1066 = vxor.u32 %v1057, 2147483648
        %v1067 = vmul.f32 %v1066, 1.442695
        %v1068 = vpow.pop %v1067
        %v1069 = vadd.f32 %v1068, 1.0
        %v1070 = vrcp.pop %v1069
        %v1071 = vmul.f32 1.0, %v1070
        %v1072 = vtanh.pop %v1058
        %v1073 = vxor.u32 %v1059, 2147483648
        %v1074 = vmul.f32 %v1073, 1.442695
        %v1075 = vpow.pop %v1074
        %v1076 = vadd.f32 %v1075, 1.0
        %v1077 = vrcp.pop %v1076
        %v1078 = vmul.f32 1.0, %v1077
        %v1079 = vmul.f32 %v1071, %v972
        %v1080 = vmul.f32 %v1065, %v1072
        %v1081 = vadd.f32 %v1079, %v1080
        %v1082 = vtanh.pop %v1081
        %v1083 = vmul.f32 %v1078, %v1082
        %s1084 = scalar_lea.vmem %s279, 24 [#allocation9]
        %1085 = vst [vmem:[%s1084] sm:$0xff] %v1083
        %1086 = vadd.xlane.f32.xlu0 %v1083
        %v1087 = vpop.xlane.xlu0 %1086
        %v1088 = vmul.f32 %v1087, %v332
        %v1089 = vmul.f32 %v1083, %v1083
        %1090 = vadd.xlane.f32.xlu0 %v1089
        %v1091 = vpop.xlane.xlu0 %1090
        %v1092 = vmul.f32 %v1091, %v332
        %v1093 = vmul.f32 %v1088, %v1088
        %v1094 = vsub.f32 %v1092, %v1093
        %v1095 = vsub.f32 %v1083, %v1088
        %v1096 = vadd.f32 %v1094, 1e-05
        %v1097 = vrsqrt.pop %v1096
        %v1098 = vmul.f32 %v1095, %v1097
        %v1099 = vmul.f32 %v1098, %v348
        %v1100 = vadd.f32 %v1099, %v355
        %1101 = vadd.xlane.f32.xlu0 %v1081
        %v1102 = vpop.xlane.xlu0 %1101
        %v1103 = vmul.f32 %v1102, %v332
        %v1104 = vmul.f32 %v1081, %v1081
        %1105 = vadd.xlane.f32.xlu0 %v1104
        %v1106 = vpop.xlane.xlu0 %1105
        %v1107 = vmul.f32 %v1106, %v332
        %v1108 = vmul.f32 %v1103, %v1103
        %v1109 = vsub.f32 %v1107, %v1108
        %v1110 = vsub.f32 %v1081, %v1103
        %v1111 = vadd.f32 %v1109, 1e-05
        %v1112 = vrsqrt.pop %v1111
        %v1113 = vmul.f32 %v1110, %v1112
        %v1114 = vmul.f32 %v1113, %v375
        %v1115 = vadd.f32 %v1114, %v382
        %v1116 = vpack.c.bf16 %v1100, %v1100
        %1117 = vmatprep.subr.bf16.mxu0 %v483
        %1118 = vmatpush1.bf16.msra.mxu0 %v482
        %1119 = vmatprep.subr.bf16.mxu0 %v487
        %1120 = vmatpush1.bf16.msra.mxu0 %v486
        %1121 = vmatprep.subr.bf16.mxu0 %v491
        %1122 = vmatpush1.bf16.msra.mxu0 %v490
        %1123 = vmatprep.subr.bf16.mxu0 %v495
        %1124 = vmatpush1.bf16.msra.mxu0 %v494
        %1125 = vmatprep.subr.bf16.mxu0 %v499
        %1126 = vmatpush1.bf16.msra.mxu0 %v498
        %1127 = vmatprep.subr.bf16.mxu0 %v503
        %1128 = vmatpush1.bf16.msra.mxu0 %v502
        %1129 = vmatprep.subr.bf16.mxu0 %v507
        %1130 = vmatpush1.bf16.msra.mxu0 %v506
        %1131 = vmatprep.subr.bf16.mxu0 %v511
        %1132 = vmatpush1.bf16.msra.mxu0 %v510
        %1133 = vmatprep.subr.bf16.mxu0 0
        %1134 = vmatpush1.bf16.msra.mxu0 0
        %1135 = vmatprep.subr.bf16.mxu0 0
        %1136 = vmatpush1.bf16.msra.mxu0 0
        %1137 = vmatprep.subr.bf16.mxu0 0
        %1138 = vmatpush1.bf16.msra.mxu0 0
        %1139 = vmatprep.subr.bf16.mxu0 0
        %1140 = vmatpush1.bf16.msra.mxu0 0
        %1141 = vmatprep.subr.bf16.mxu0 0
        %1142 = vmatpush1.bf16.msra.mxu0 0
        %1143 = vmatprep.subr.bf16.mxu0 0
        %1144 = vmatpush1.bf16.msra.mxu0 0
        %1145 = vmatprep.subr.bf16.mxu0 0
        %1146 = vmatpush1.bf16.msra.mxu0 0
        %1147 = vmatprep.subr.bf16.mxu0 0
        %1148 = vmatpush1.bf16.msra.mxu0 0
        %1149 = vmatprep.mubr.bf16.mxu0 0
        %1150 = vmatmul.mubr.bf16.gmra.mrb[0].mxu0 %v1116
        %v1151 = vpop.f32.mrb[0].mxu0
        %v1152 = vadd.f32 0.0, %v1151
        %v1153 = vpop.f32.mrb[0].mxu0
        %v1154 = vadd.f32 0.0, %v1153
        %v1155 = vpop.f32.mrb[0].mxu0
        %v1156 = vpop.f32.mrb[0].mxu0
        %1157 = vdwg.mxu0
        %1158 = vmatprep.subr.bf16.mxu0 %v485
        %1159 = vmatpush1.bf16.msra.mxu0 %v484
        %1160 = vmatprep.subr.bf16.mxu0 %v489
        %1161 = vmatpush1.bf16.msra.mxu0 %v488
        %1162 = vmatprep.subr.bf16.mxu0 %v493
        %1163 = vmatpush1.bf16.msra.mxu0 %v492
        %1164 = vmatprep.subr.bf16.mxu0 %v497
        %1165 = vmatpush1.bf16.msra.mxu0 %v496
        %1166 = vmatprep.subr.bf16.mxu0 %v501
        %1167 = vmatpush1.bf16.msra.mxu0 %v500
        %1168 = vmatprep.subr.bf16.mxu0 %v505
        %1169 = vmatpush1.bf16.msra.mxu0 %v504
        %1170 = vmatprep.subr.bf16.mxu0 %v509
        %1171 = vmatpush1.bf16.msra.mxu0 %v508
        %1172 = vmatprep.subr.bf16.mxu0 %v513
        %1173 = vmatpush1.bf16.msra.mxu0 %v512
        %1174 = vmatprep.subr.bf16.mxu0 0
        %1175 = vmatpush1.bf16.msra.mxu0 0
        %1176 = vmatprep.subr.bf16.mxu0 0
        %1177 = vmatpush1.bf16.msra.mxu0 0
        %1178 = vmatprep.subr.bf16.mxu0 0
        %1179 = vmatpush1.bf16.msra.mxu0 0
        %1180 = vmatprep.subr.bf16.mxu0 0
        %1181 = vmatpush1.bf16.msra.mxu0 0
        %1182 = vmatprep.subr.bf16.mxu0 0
        %1183 = vmatpush1.bf16.msra.mxu0 0
        %1184 = vmatprep.subr.bf16.mxu0 0
        %1185 = vmatpush1.bf16.msra.mxu0 0
        %1186 = vmatprep.subr.bf16.mxu0 0
        %1187 = vmatpush1.bf16.msra.mxu0 0
        %1188 = vmatprep.subr.bf16.mxu0 0
        %1189 = vmatpush1.bf16.msra.mxu0 0
        %1190 = vmatprep.mubr.bf16.mxu0 0
        %1191 = vmatmul.mubr.bf16.gmra.mrb[0].mxu0 %v1116
        %v1192 = vpop.f32.mrb[0].mxu0
        %v1193 = vadd.f32 0.0, %v1192
        %v1194 = vpop.f32.mrb[0].mxu0
        %v1195 = vadd.f32 0.0, %v1194
        %v1196 = vpop.f32.mrb[0].mxu0
        %v1197 = vpop.f32.mrb[0].mxu0
        %1198 = vdwg.mxu0
        %v1199 = vadd.f32 %v288, %v1152
        %v1200 = vadd.f32 %v289, %v1154
        %v1201 = vadd.f32 %v290, %v1193
        %v1202 = vadd.f32 %v291, %v1195
        %v1203 = vxor.u32 %v1199, 2147483648
        %v1204 = vmul.f32 %v1203, 1.442695
        %v1205 = vpow.pop %v1204
        %v1206 = vadd.f32 %v1205, 1.0
        %v1207 = vrcp.pop %v1206
        %v1208 = vmul.f32 1.0, %v1207
        %v1209 = vxor.u32 %v1200, 2147483648
        %v1210 = vmul.f32 %v1209, 1.442695
        %v1211 = vpow.pop %v1210
        %v1212 = vadd.f32 %v1211, 1.0
        %v1213 = vrcp.pop %v1212
        %v1214 = vmul.f32 1.0, %v1213
        %v1215 = vtanh.pop %v1201
        %v1216 = vxor.u32 %v1202, 2147483648
        %v1217 = vmul.f32 %v1216, 1.442695
        %v1218 = vpow.pop %v1217
        %v1219 = vadd.f32 %v1218, 1.0
        %v1220 = vrcp.pop %v1219
        %v1221 = vmul.f32 1.0, %v1220
        %v1222 = vmul.f32 %v1214, %v1115
        %v1223 = vmul.f32 %v1208, %v1215
        %v1224 = vadd.f32 %v1222, %v1223
        %v1225 = vtanh.pop %v1224
        %v1226 = vmul.f32 %v1221, %v1225
        %s1227 = scalar_lea.vmem %s279, 32 [#allocation9]
        %1228 = vst [vmem:[%s1227] sm:$0xff] %v1226
        %1229 = vadd.xlane.f32.xlu0 %v1226
        %v1230 = vpop.xlane.xlu0 %1229
        %v1231 = vmul.f32 %v1230, %v332
        %v1232 = vmul.f32 %v1226, %v1226
        %1233 = vadd.xlane.f32.xlu0 %v1232
        %v1234 = vpop.xlane.xlu0 %1233
        %v1235 = vmul.f32 %v1234, %v332
        %v1236 = vmul.f32 %v1231, %v1231
        %v1237 = vsub.f32 %v1235, %v1236
        %v1238 = vsub.f32 %v1226, %v1231
        %v1239 = vadd.f32 %v1237, 1e-05
        %v1240 = vrsqrt.pop %v1239
        %v1241 = vmul.f32 %v1238, %v1240
        %v1242 = vmul.f32 %v1241, %v348
        %v1243 = vadd.f32 %v1242, %v355
        %1244 = vadd.xlane.f32.xlu0 %v1224
        %v1245 = vpop.xlane.xlu0 %1244
        %v1246 = vmul.f32 %v1245, %v332
        %v1247 = vmul.f32 %v1224, %v1224
        %1248 = vadd.xlane.f32.xlu0 %v1247
        %v1249 = vpop.xlane.xlu0 %1248
        %v1250 = vmul.f32 %v1249, %v332
        %v1251 = vmul.f32 %v1246, %v1246
        %v1252 = vsub.f32 %v1250, %v1251
        %v1253 = vsub.f32 %v1224, %v1246
        %v1254 = vadd.f32 %v1252, 1e-05
        %v1255 = vrsqrt.pop %v1254
        %v1256 = vmul.f32 %v1253, %v1255
        %v1257 = vmul.f32 %v1256, %v375
        %v1258 = vadd.f32 %v1257, %v382
        %v1259 = vpack.c.bf16 %v1243, %v1243
        %1260 = vmatprep.subr.bf16.mxu0 %v483
        %1261 = vmatpush1.bf16.msra.mxu0 %v482
        %1262 = vmatprep.subr.bf16.mxu0 %v487
        %1263 = vmatpush1.bf16.msra.mxu0 %v486
        %1264 = vmatprep.subr.bf16.mxu0 %v491
        %1265 = vmatpush1.bf16.msra.mxu0 %v490
        %1266 = vmatprep.subr.bf16.mxu0 %v495
        %1267 = vmatpush1.bf16.msra.mxu0 %v494
        %1268 = vmatprep.subr.bf16.mxu0 %v499
        %1269 = vmatpush1.bf16.msra.mxu0 %v498
        %1270 = vmatprep.subr.bf16.mxu0 %v503
        %1271 = vmatpush1.bf16.msra.mxu0 %v502
        %1272 = vmatprep.subr.bf16.mxu0 %v507
        %1273 = vmatpush1.bf16.msra.mxu0 %v506
        %1274 = vmatprep.subr.bf16.mxu0 %v511
        %1275 = vmatpush1.bf16.msra.mxu0 %v510
        %1276 = vmatprep.subr.bf16.mxu0 0
        %1277 = vmatpush1.bf16.msra.mxu0 0
        %1278 = vmatprep.subr.bf16.mxu0 0
        %1279 = vmatpush1.bf16.msra.mxu0 0
        %1280 = vmatprep.subr.bf16.mxu0 0
        %1281 = vmatpush1.bf16.msra.mxu0 0
        %1282 = vmatprep.subr.bf16.mxu0 0
        %1283 = vmatpush1.bf16.msra.mxu0 0
        %1284 = vmatprep.subr.bf16.mxu0 0
        %1285 = vmatpush1.bf16.msra.mxu0 0
        %1286 = vmatprep.subr.bf16.mxu0 0
        %1287 = vmatpush1.bf16.msra.mxu0 0
        %1288 = vmatprep.subr.bf16.mxu0 0
        %1289 = vmatpush1.bf16.msra.mxu0 0
        %1290 = vmatprep.subr.bf16.mxu0 0
        %1291 = vmatpush1.bf16.msra.mxu0 0
        %1292 = vmatprep.mubr.bf16.mxu0 0
        %1293 = vmatmul.mubr.bf16.gmra.mrb[0].mxu0 %v1259
        %v1294 = vpop.f32.mrb[0].mxu0
        %v1295 = vadd.f32 0.0, %v1294
        %v1296 = vpop.f32.mrb[0].mxu0
        %v1297 = vadd.f32 0.0, %v1296
        %v1298 = vpop.f32.mrb[0].mxu0
        %v1299 = vpop.f32.mrb[0].mxu0
        %1300 = vdwg.mxu0
        %1301 = vmatprep.subr.bf16.mxu0 %v485
        %1302 = vmatpush1.bf16.msra.mxu0 %v484
        %1303 = vmatprep.subr.bf16.mxu0 %v489
        %1304 = vmatpush1.bf16.msra.mxu0 %v488
        %1305 = vmatprep.subr.bf16.mxu0 %v493
        %1306 = vmatpush1.bf16.msra.mxu0 %v492
        %1307 = vmatprep.subr.bf16.mxu0 %v497
        %1308 = vmatpush1.bf16.msra.mxu0 %v496
        %1309 = vmatprep.subr.bf16.mxu0 %v501
        %1310 = vmatpush1.bf16.msra.mxu0 %v500
        %1311 = vmatprep.subr.bf16.mxu0 %v505
        %1312 = vmatpush1.bf16.msra.mxu0 %v504
        %1313 = vmatprep.subr.bf16.mxu0 %v509
        %1314 = vmatpush1.bf16.msra.mxu0 %v508
        %1315 = vmatprep.subr.bf16.mxu0 %v513
        %1316 = vmatpush1.bf16.msra.mxu0 %v512
        %1317 = vmatprep.subr.bf16.mxu0 0
        %1318 = vmatpush1.bf16.msra.mxu0 0
        %1319 = vmatprep.subr.bf16.mxu0 0
        %1320 = vmatpush1.bf16.msra.mxu0 0
        %1321 = vmatprep.subr.bf16.mxu0 0
        %1322 = vmatpush1.bf16.msra.mxu0 0
        %1323 = vmatprep.subr.bf16.mxu0 0
        %1324 = vmatpush1.bf16.msra.mxu0 0
        %1325 = vmatprep.subr.bf16.mxu0 0
        %1326 = vmatpush1.bf16.msra.mxu0 0
        %1327 = vmatprep.subr.bf16.mxu0 0
        %1328 = vmatpush1.bf16.msra.mxu0 0
        %1329 = vmatprep.subr.bf16.mxu0 0
        %1330 = vmatpush1.bf16.msra.mxu0 0
        %1331 = vmatprep.subr.bf16.mxu0 0
        %1332 = vmatpush1.bf16.msra.mxu0 0
        %1333 = vmatprep.mubr.bf16.mxu0 0
        %1334 = vmatmul.mubr.bf16.gmra.mrb[0].mxu0 %v1259
        %v1335 = vpop.f32.mrb[0].mxu0
        %v1336 = vadd.f32 0.0, %v1335
        %v1337 = vpop.f32.mrb[0].mxu0
        %v1338 = vadd.f32 0.0, %v1337
        %v1339 = vpop.f32.mrb[0].mxu0
        %v1340 = vpop.f32.mrb[0].mxu0
        %1341 = vdwg.mxu0
        %v1342 = vadd.f32 %v288, %v1295
        %v1343 = vadd.f32 %v289, %v1297
        %v1344 = vadd.f32 %v290, %v1336
        %v1345 = vadd.f32 %v291, %v1338
        %v1346 = vxor.u32 %v1342, 2147483648
        %v1347 = vmul.f32 %v1346, 1.442695
        %v1348 = vpow.pop %v1347
        %v1349 = vadd.f32 %v1348, 1.0
        %v1350 = vrcp.pop %v1349
        %v1351 = vmul.f32 1.0, %v1350
        %v1352 = vxor.u32 %v1343, 2147483648
        %v1353 = vmul.f32 %v1352, 1.442695
        %v1354 = vpow.pop %v1353
        %v1355 = vadd.f32 %v1354, 1.0
        %v1356 = vrcp.pop %v1355
        %v1357 = vmul.f32 1.0, %v1356
        %v1358 = vtanh.pop %v1344
        %v1359 = vxor.u32 %v1345, 2147483648
        %v1360 = vmul.f32 %v1359, 1.442695
        %v1361 = vpow.pop %v1360
        %v1362 = vadd.f32 %v1361, 1.0
        %v1363 = vrcp.pop %v1362
        %v1364 = vmul.f32 1.0, %v1363
        %v1365 = vmul.f32 %v1357, %v1258
        %v1366 = vmul.f32 %v1351, %v1358
        %v1367 = vadd.f32 %v1365, %v1366
        %v1368 = vtanh.pop %v1367
        %v1369 = vmul.f32 %v1364, %v1368
        %s1370 = scalar_lea.vmem %s279, 40 [#allocation9]
        %1371 = vst [vmem:[%s1370] sm:$0xff] %v1369
        %1372 = vadd.xlane.f32.xlu0 %v1369
        %v1373 = vpop.xlane.xlu0 %1372
        %v1374 = vmul.f32 %v1373, %v332
        %v1375 = vmul.f32 %v1369, %v1369
        %1376 = vadd.xlane.f32.xlu0 %v1375
        %v1377 = vpop.xlane.xlu0 %1376
        %v1378 = vmul.f32 %v1377, %v332
        %v1379 = vmul.f32 %v1374, %v1374
        %v1380 = vsub.f32 %v1378, %v1379
        %v1381 = vsub.f32 %v1369, %v1374
        %v1382 = vadd.f32 %v1380, 1e-05
        %v1383 = vrsqrt.pop %v1382
        %v1384 = vmul.f32 %v1381, %v1383
        %v1385 = vmul.f32 %v1384, %v348
        %v1386 = vadd.f32 %v1385, %v355
        %1387 = vadd.xlane.f32.xlu0 %v1367
        %v1388 = vpop.xlane.xlu0 %1387
        %v1389 = vmul.f32 %v1388, %v332
        %v1390 = vmul.f32 %v1367, %v1367
        %1391 = vadd.xlane.f32.xlu0 %v1390
        %v1392 = vpop.xlane.xlu0 %1391
        %v1393 = vmul.f32 %v1392, %v332
        %v1394 = vmul.f32 %v1389, %v1389
        %v1395 = vsub.f32 %v1393, %v1394
        %v1396 = vsub.f32 %v1367, %v1389
        %v1397 = vadd.f32 %v1395, 1e-05
        %v1398 = vrsqrt.pop %v1397
        %v1399 = vmul.f32 %v1396, %v1398
        %v1400 = vmul.f32 %v1399, %v375
        %v1401 = vadd.f32 %v1400, %v382
        %v1402 = vpack.c.bf16 %v1386, %v1386
        %1403 = vmatprep.subr.bf16.mxu0 %v483
        %1404 = vmatpush1.bf16.msra.mxu0 %v482
        %1405 = vmatprep.subr.bf16.mxu0 %v487
        %1406 = vmatpush1.bf16.msra.mxu0 %v486
        %1407 = vmatprep.subr.bf16.mxu0 %v491
        %1408 = vmatpush1.bf16.msra.mxu0 %v490
        %1409 = vmatprep.subr.bf16.mxu0 %v495
        %1410 = vmatpush1.bf16.msra.mxu0 %v494
        %1411 = vmatprep.subr.bf16.mxu0 %v499
        %1412 = vmatpush1.bf16.msra.mxu0 %v498
        %1413 = vmatprep.subr.bf16.mxu0 %v503
        %1414 = vmatpush1.bf16.msra.mxu0 %v502
        %1415 = vmatprep.subr.bf16.mxu0 %v507
        %1416 = vmatpush1.bf16.msra.mxu0 %v506
        %1417 = vmatprep.subr.bf16.mxu0 %v511
        %1418 = vmatpush1.bf16.msra.mxu0 %v510
        %1419 = vmatprep.subr.bf16.mxu0 0
        %1420 = vmatpush1.bf16.msra.mxu0 0
        %1421 = vmatprep.subr.bf16.mxu0 0
        %1422 = vmatpush1.bf16.msra.mxu0 0
        %1423 = vmatprep.subr.bf16.mxu0 0
        %1424 = vmatpush1.bf16.msra.mxu0 0
        %1425 = vmatprep.subr.bf16.mxu0 0
        %1426 = vmatpush1.bf16.msra.mxu0 0
        %1427 = vmatprep.subr.bf16.mxu0 0
        %1428 = vmatpush1.bf16.msra.mxu0 0
        %1429 = vmatprep.subr.bf16.mxu0 0
        %1430 = vmatpush1.bf16.msra.mxu0 0
        %1431 = vmatprep.subr.bf16.mxu0 0
        %1432 = vmatpush1.bf16.msra.mxu0 0
        %1433 = vmatprep.subr.bf16.mxu0 0
        %1434 = vmatpush1.bf16.msra.mxu0 0
        %1435 = vmatprep.mubr.bf16.mxu0 0
        %1436 = vmatmul.mubr.bf16.gmra.mrb[0].mxu0 %v1402
        %v1437 = vpop.f32.mrb[0].mxu0
        %v1438 = vadd.f32 0.0, %v1437
        %v1439 = vpop.f32.mrb[0].mxu0
        %v1440 = vadd.f32 0.0, %v1439
        %v1441 = vpop.f32.mrb[0].mxu0
        %v1442 = vpop.f32.mrb[0].mxu0
        %1443 = vdwg.mxu0
        %1444 = vmatprep.subr.bf16.mxu0 %v485
        %1445 = vmatpush1.bf16.msra.mxu0 %v484
        %1446 = vmatprep.subr.bf16.mxu0 %v489
        %1447 = vmatpush1.bf16.msra.mxu0 %v488
        %1448 = vmatprep.subr.bf16.mxu0 %v493
        %1449 = vmatpush1.bf16.msra.mxu0 %v492
        %1450 = vmatprep.subr.bf16.mxu0 %v497
        %1451 = vmatpush1.bf16.msra.mxu0 %v496
        %1452 = vmatprep.subr.bf16.mxu0 %v501
        %1453 = vmatpush1.bf16.msra.mxu0 %v500
        %1454 = vmatprep.subr.bf16.mxu0 %v505
        %1455 = vmatpush1.bf16.msra.mxu0 %v504
        %1456 = vmatprep.subr.bf16.mxu0 %v509
        %1457 = vmatpush1.bf16.msra.mxu0 %v508
        %1458 = vmatprep.subr.bf16.mxu0 %v513
        %1459 = vmatpush1.bf16.msra.mxu0 %v512
        %1460 = vmatprep.subr.bf16.mxu0 0
        %1461 = vmatpush1.bf16.msra.mxu0 0
        %1462 = vmatprep.subr.bf16.mxu0 0
        %1463 = vmatpush1.bf16.msra.mxu0 0
        %1464 = vmatprep.subr.bf16.mxu0 0
        %1465 = vmatpush1.bf16.msra.mxu0 0
        %1466 = vmatprep.subr.bf16.mxu0 0
        %1467 = vmatpush1.bf16.msra.mxu0 0
        %1468 = vmatprep.subr.bf16.mxu0 0
        %1469 = vmatpush1.bf16.msra.mxu0 0
        %1470 = vmatprep.subr.bf16.mxu0 0
        %1471 = vmatpush1.bf16.msra.mxu0 0
        %1472 = vmatprep.subr.bf16.mxu0 0
        %1473 = vmatpush1.bf16.msra.mxu0 0
        %1474 = vmatprep.subr.bf16.mxu0 0
        %1475 = vmatpush1.bf16.msra.mxu0 0
        %1476 = vmatprep.mubr.bf16.mxu0 0
        %1477 = vmatmul.mubr.bf16.gmra.mrb[0].mxu0 %v1402
        %v1478 = vpop.f32.mrb[0].mxu0
        %v1479 = vadd.f32 0.0, %v1478
        %v1480 = vpop.f32.mrb[0].mxu0
        %v1481 = vadd.f32 0.0, %v1480
        %v1482 = vpop.f32.mrb[0].mxu0
        %v1483 = vpop.f32.mrb[0].mxu0
        %1484 = vdwg.mxu0
        %v1485 = vadd.f32 %v288, %v1438
        %v1486 = vadd.f32 %v289, %v1440
        %v1487 = vadd.f32 %v290, %v1479
        %v1488 = vadd.f32 %v291, %v1481
        %v1489 = vxor.u32 %v1485, 2147483648
        %v1490 = vmul.f32 %v1489, 1.442695
        %v1491 = vpow.pop %v1490
        %v1492 = vadd.f32 %v1491, 1.0
        %v1493 = vrcp.pop %v1492
        %v1494 = vmul.f32 1.0, %v1493
        %v1495 = vxor.u32 %v1486, 2147483648
        %v1496 = vmul.f32 %v1495, 1.442695
        %v1497 = vpow.pop %v1496
        %v1498 = vadd.f32 %v1497, 1.0
        %v1499 = vrcp.pop %v1498
        %v1500 = vmul.f32 1.0, %v1499
        %v1501 = vtanh.pop %v1487
        %v1502 = vxor.u32 %v1488, 2147483648
        %v1503 = vmul.f32 %v1502, 1.442695
        %v1504 = vpow.pop %v1503
        %v1505 = vadd.f32 %v1504, 1.0
        %v1506 = vrcp.pop %v1505
        %v1507 = vmul.f32 1.0, %v1506
        %v1508 = vmul.f32 %v1500, %v1401
        %v1509 = vmul.f32 %v1494, %v1501
        %v1510 = vadd.f32 %v1508, %v1509
        %v1511 = vtanh.pop %v1510
        %v1512 = vmul.f32 %v1507, %v1511
        %s1513 = scalar_lea.vmem %s279, 48 [#allocation9]
        %1514 = vst [vmem:[%s1513] sm:$0xff] %v1512
        %1515 = vadd.xlane.f32.xlu0 %v1512
        %v1516 = vpop.xlane.xlu0 %1515
        %v1517 = vmul.f32 %v1516, %v332
        %v1518 = vmul.f32 %v1512, %v1512
        %1519 = vadd.xlane.f32.xlu0 %v1518
        %v1520 = vpop.xlane.xlu0 %1519
        %v1521 = vmul.f32 %v1520, %v332
        %v1522 = vmul.f32 %v1517, %v1517
        %v1523 = vsub.f32 %v1521, %v1522
        %v1524 = vsub.f32 %v1512, %v1517
        %v1525 = vadd.f32 %v1523, 1e-05
        %v1526 = vrsqrt.pop %v1525
        %v1527 = vmul.f32 %v1524, %v1526
        %v1528 = vmul.f32 %v1527, %v348
        %v1529 = vadd.f32 %v1528, %v355
        %1530 = vadd.xlane.f32.xlu0 %v1510
        %v1531 = vpop.xlane.xlu0 %1530
        %v1532 = vmul.f32 %v1531, %v332
        %v1533 = vmul.f32 %v1510, %v1510
        %1534 = vadd.xlane.f32.xlu0 %v1533
        %v1535 = vpop.xlane.xlu0 %1534
        %v1536 = vmul.f32 %v1535, %v332
        %v1537 = vmul.f32 %v1532, %v1532
        %v1538 = vsub.f32 %v1536, %v1537
        %v1539 = vsub.f32 %v1510, %v1532
        %v1540 = vadd.f32 %v1538, 1e-05
        %v1541 = vrsqrt.pop %v1540
        %v1542 = vmul.f32 %v1539, %v1541
        %v1543 = vmul.f32 %v1542, %v375
        %v1544 = vadd.f32 %v1543, %v382
        %v1545 = vpack.c.bf16 %v1529, %v1529
        %1546 = vmatprep.subr.bf16.mxu0 %v483
        %1547 = vmatpush1.bf16.msra.mxu0 %v482
        %1548 = vmatprep.subr.bf16.mxu0 %v487
        %1549 = vmatpush1.bf16.msra.mxu0 %v486
        %1550 = vmatprep.subr.bf16.mxu0 %v491
        %1551 = vmatpush1.bf16.msra.mxu0 %v490
        %1552 = vmatprep.subr.bf16.mxu0 %v495
        %1553 = vmatpush1.bf16.msra.mxu0 %v494
        %1554 = vmatprep.subr.bf16.mxu0 %v499
        %1555 = vmatpush1.bf16.msra.mxu0 %v498
        %1556 = vmatprep.subr.bf16.mxu0 %v503
        %1557 = vmatpush1.bf16.msra.mxu0 %v502
        %1558 = vmatprep.subr.bf16.mxu0 %v507
        %1559 = vmatpush1.bf16.msra.mxu0 %v506
        %1560 = vmatprep.subr.bf16.mxu0 %v511
        %1561 = vmatpush1.bf16.msra.mxu0 %v510
        %1562 = vmatprep.subr.bf16.mxu0 0
        %1563 = vmatpush1.bf16.msra.mxu0 0
        %1564 = vmatprep.subr.bf16.mxu0 0
        %1565 = vmatpush1.bf16.msra.mxu0 0
        %1566 = vmatprep.subr.bf16.mxu0 0
        %1567 = vmatpush1.bf16.msra.mxu0 0
        %1568 = vmatprep.subr.bf16.mxu0 0
        %1569 = vmatpush1.bf16.msra.mxu0 0
        %1570 = vmatprep.subr.bf16.mxu0 0
        %1571 = vmatpush1.bf16.msra.mxu0 0
        %1572 = vmatprep.subr.bf16.mxu0 0
        %1573 = vmatpush1.bf16.msra.mxu0 0
        %1574 = vmatprep.subr.bf16.mxu0 0
        %1575 = vmatpush1.bf16.msra.mxu0 0
        %1576 = vmatprep.subr.bf16.mxu0 0
        %1577 = vmatpush1.bf16.msra.mxu0 0
        %1578 = vmatprep.mubr.bf16.mxu0 0
        %1579 = vmatmul.mubr.bf16.gmra.mrb[0].mxu0 %v1545
        %v1580 = vpop.f32.mrb[0].mxu0
        %v1581 = vadd.f32 0.0, %v1580
        %v1582 = vpop.f32.mrb[0].mxu0
        %v1583 = vadd.f32 0.0, %v1582
        %v1584 = vpop.f32.mrb[0].mxu0
        %v1585 = vpop.f32.mrb[0].mxu0
        %1586 = vdwg.mxu0
        %1587 = vmatprep.subr.bf16.mxu0 %v485
        %1588 = vmatpush1.bf16.msra.mxu0 %v484
        %1589 = vmatprep.subr.bf16.mxu0 %v489
        %1590 = vmatpush1.bf16.msra.mxu0 %v488
        %1591 = vmatprep.subr.bf16.mxu0 %v493
        %1592 = vmatpush1.bf16.msra.mxu0 %v492
        %1593 = vmatprep.subr.bf16.mxu0 %v497
        %1594 = vmatpush1.bf16.msra.mxu0 %v496
        %1595 = vmatprep.subr.bf16.mxu0 %v501
        %1596 = vmatpush1.bf16.msra.mxu0 %v500
        %1597 = vmatprep.subr.bf16.mxu0 %v505
        %1598 = vmatpush1.bf16.msra.mxu0 %v504
        %1599 = vmatprep.subr.bf16.mxu0 %v509
        %1600 = vmatpush1.bf16.msra.mxu0 %v508
        %1601 = vmatprep.subr.bf16.mxu0 %v513
        %1602 = vmatpush1.bf16.msra.mxu0 %v512
        %1603 = vmatprep.subr.bf16.mxu0 0
        %1604 = vmatpush1.bf16.msra.mxu0 0
        %1605 = vmatprep.subr.bf16.mxu0 0
        %1606 = vmatpush1.bf16.msra.mxu0 0
        %1607 = vmatprep.subr.bf16.mxu0 0
        %1608 = vmatpush1.bf16.msra.mxu0 0
        %1609 = vmatprep.subr.bf16.mxu0 0
        %1610 = vmatpush1.bf16.msra.mxu0 0
        %1611 = vmatprep.subr.bf16.mxu0 0
        %1612 = vmatpush1.bf16.msra.mxu0 0
        %1613 = vmatprep.subr.bf16.mxu0 0
        %1614 = vmatpush1.bf16.msra.mxu0 0
        %1615 = vmatprep.subr.bf16.mxu0 0
        %1616 = vmatpush1.bf16.msra.mxu0 0
        %1617 = vmatprep.subr.bf16.mxu0 0
        %1618 = vmatpush1.bf16.msra.mxu0 0
        %1619 = vmatprep.mubr.bf16.mxu0 0
        %1620 = vmatmul.mubr.bf16.gmra.mrb[0].mxu0 %v1545
        %v1621 = vpop.f32.mrb[0].mxu0
        %v1622 = vadd.f32 0.0, %v1621
        %v1623 = vpop.f32.mrb[0].mxu0
        %v1624 = vadd.f32 0.0, %v1623
        %v1625 = vpop.f32.mrb[0].mxu0
        %v1626 = vpop.f32.mrb[0].mxu0
        %1627 = vdwg.mxu0
        %v1628 = vadd.f32 %v288, %v1581
        %v1629 = vadd.f32 %v289, %v1583
        %v1630 = vadd.f32 %v290, %v1622
        %v1631 = vadd.f32 %v291, %v1624
        %v1632 = vxor.u32 %v1628, 2147483648
        %v1633 = vmul.f32 %v1632, 1.442695
        %v1634 = vpow.pop %v1633
        %v1635 = vadd.f32 %v1634, 1.0
        %v1636 = vrcp.pop %v1635
        %v1637 = vmul.f32 1.0, %v1636
        %v1638 = vxor.u32 %v1629, 2147483648
        %v1639 = vmul.f32 %v1638, 1.442695
        %v1640 = vpow.pop %v1639
        %v1641 = vadd.f32 %v1640, 1.0
        %v1642 = vrcp.pop %v1641
        %v1643 = vmul.f32 1.0, %v1642
        %v1644 = vtanh.pop %v1630
        %v1645 = vxor.u32 %v1631, 2147483648
        %v1646 = vmul.f32 %v1645, 1.442695
        %v1647 = vpow.pop %v1646
        %v1648 = vadd.f32 %v1647, 1.0
        %v1649 = vrcp.pop %v1648
        %v1650 = vmul.f32 1.0, %v1649
        %v1651 = vmul.f32 %v1643, %v1544
        %v1652 = vmul.f32 %v1637, %v1644
        %v1653 = vadd.f32 %v1651, %v1652
        %v1654 = vtanh.pop %v1653
        %v1655 = vmul.f32 %v1650, %v1654
        %s1656 = scalar_lea.vmem %s279, 56 [#allocation9]
        %1657 = vst [vmem:[%s1656] sm:$0xff] %v1655
        %1658 = vst [vmem:[#allocation2] sm:$0xff] %v1655
        %1659 = vst [vmem:[#allocation3] sm:$0xff] %v1653
        %s1660 = sand.u32 %s175, 1
        %s1661 = scalar_lea.sflag [#allocation6], %s1660
        %s1662 = sand.u32 %s175, 1
        %s1663 = smul.addr %s1662, 64
        %s1664 = scalar_lea.vmem [#allocation9], %s1663
        // Predicated region
        $region57: #{tpu_custom_call.1} parent=43 // pred_check
          %p1665 = pneg %p185
        $region58: #{tpu_custom_call.1} parent=43 // pred_check_branch
          %1667 = sbr.rel (%p1665) target = $region60
        $region59: #{tpu_custom_call.1} parent=43 // pred_region
          %s1668 = smul.u32 8, %s27
          %s1670 = ssub.s32 1024, 1024
          %1671 = vsyncadd %s1661, %s1670
          %s1672 = sadd.s32 %s26, %s1668
          %s1673 = smul.addr %s1672, 128
          %s1674 = scalar_lea.hbm %s6, %s1673
          %s1675 = sshll.u32 %s1664, 4
          %s1676 = int_to_ptr.vmem [resolvable:$true] %s1675
          %1681 = dma.vmem_to_hbm [thread:$0]  %s1676, 1024, %s1674, %s1661, 128, 128, 8
        $region60: #{tpu_custom_call.1} parent=43 // pred_fallthru
          _
      $region44: #{tpu_custom_call.1} parent=5 // pred_fallthru
        _
      %p1682 = scmp.le.s32.totalorder 2, %s17
      // Predicated region
      $region61: #{tpu_custom_call.1} parent=5 // pred_check
        %p1683 = pneg %p1682
      $region62: #{tpu_custom_call.1} parent=5 // pred_check_branch
        %1685 = sbr.rel (%p1683) target = $region64
      $region63: #{tpu_custom_call.1} parent=5 // pred_region
        %s1686 = ssub.s32 %s17, 2
        // Predicated region
        $region65: #{tpu_custom_call.1} parent=63 // pred_check
          %p1687 = pneg %p191
        $region66: #{tpu_custom_call.1} parent=63 // pred_check_branch
          %1689 = sbr.rel (%p1687) target = $region68
        $region67: #{tpu_custom_call.1} parent=63 // pred_region
          %s1690 = sand.u32 %s176, 1
          %s1691 = scalar_lea.sflag [#allocation6], %s1690
          %s1692 = sand.u32 %s176, 1
          %s1693 = smul.addr %s1692, 64
          %s1694 = scalar_lea.vmem [#allocation9], %s1693
          %1695 = dma.done %s1691, 1024
        $region68: #{tpu_custom_call.1} parent=63 // pred_fallthru
          _
      $region64: #{tpu_custom_call.1} parent=5 // pred_fallthru
        _
    $region6: #{tpu_custom_call.1} parent=1 // loop_footer
      %s21 = sadd.s32 1, %s17
    $region7: #{tpu_custom_call.1} parent=1 // loop_footer_branch
      %16 = sbr.rel target = $region3
    $region8: #{tpu_custom_call.1} parent=1 // loop_exit
      _
    %1696 = vsyncpa [#allocation5], 1
    %s1697 = scalar_lea.sflag [#allocation5], 1
    %1698 = vsyncpa %s1697, 1
    %1699 = vsyncpa [#allocation8], 1
    %1700 = vsyncpa [#allocation6], 1
    %s1701 = scalar_lea.sflag [#allocation6], 1
    %1702 = vsyncpa %s1701, 1

</llo_original>
